<compile_context>
chip_gen: v7x
topology: tpu7x:2x2x1
jax: 0.10.0
libtpu: 0.0.40
codegen_flags: <defaults>
</compile_context>

<pallas_src>
import jax
import jax.numpy as jnp
from jax.experimental import pallas as pl
from jax.experimental.pallas import tpu as pltpu

NEG_SLOPE = 0.2  # LeakyReLU(0.2)
_OFFS = tuple((oy, ox) for oy in (-1, 0, 1) for ox in (-1, 0, 1))  # tap order ky*3+kx


def _leaky(x):
    return jnp.where(x > 0, x, NEG_SLOPE * x)


def _make_kernel(H, W, NB, Cin, Cout, cdt):
    HW = H * W
    L = NB * HW          # lane extent of one grid block (batch concatenated on lanes)
    PAD = W + 1          # max |flat shift| of a 3x3 SAME-conv tap

    def kernel(x_ref, w1_ref, w2_ref, wr_ref, m_ref, o_ref, xd_s, hd_s):
        # x_ref : (NB, Cin, HW)    bf16  NCHW-flat activations for this block
        # w1_ref: (9, Cout, Cin)   bf16  conv1 weights, tap-major
        # w2_ref: (9, Cout, Cout)  bf16  conv2 weights, tap-major
        # wr_ref: (Cout, Cin)      bf16  1x1 residual projection (identity if nin==nout)
        # m_ref : (8, L)           bf16  SAME-padding validity masks (off-center taps)
        # o_ref : (NB, Cout, HW)   bf16  output (lane-dense stores)
        # xd_s  : (Cin,  L+2*PAD)  bf16  halo-padded staging for x
        # hd_s  : (Cout, L+2*PAD)  bf16  halo-padded staging for LeakyReLU(conv1(x))

        # Zero the halo lanes every step (tiny: 2*PAD lanes) so masked taps can
        # never read stale VMEM; the interior is fully overwritten below.
        xd_s[:, :PAD] = jnp.zeros((Cin, PAD), cdt)
        xd_s[:, PAD + L:] = jnp.zeros((Cin, PAD), cdt)
        hd_s[:, :PAD] = jnp.zeros((Cout, PAD), cdt)
        hd_s[:, PAD + L:] = jnp.zeros((Cout, PAD), cdt)

        # Stage the NB images lane-concatenated at offset PAD.
        for n in range(NB):
            xd_s[:, PAD + n * HW:PAD + (n + 1) * HW] = x_ref[n]

        masks = m_ref[...]  # (8, L) bf16, precomputed host-side

        def conv3x3(stage_ref, w_ref):
            # 9 accumulating (Cout, C) @ (C, L) matmuls over shifted views of the
            # staging scratch -- no im2col patch is materialized.  Reads that
            # cross an image boundary inside the lane-concatenated block are
            # exactly the mask==0 positions, so they contribute nothing.
            acc = None
            for k, (oy, ox) in enumerate(_OFFS):
                s = PAD + oy * W + ox
                tap = stage_ref[:, s:s + L]
                if (oy, ox) != (0, 0):
                    mi = k if k < 4 else k - 1
                    tap = tap * masks[mi:mi + 1, :]
                d = jnp.dot(w_ref[k], tap, preferred_element_type=jnp.float32)
                acc = d if acc is None else acc + d  # MRB-chained on v7x, vreg f32 on v5e/v6e
            return acc  # (Cout, L) f32

        # ---- conv1 + LeakyReLU ----
        h1 = _leaky(conv3x3(xd_s, w1_ref)).astype(cdt)
        hd_s[:, PAD:PAD + L] = h1

        # ---- conv2 + fused 1x1 residual + final LeakyReLU ----
        y = conv3x3(hd_s, w2_ref)
        y = y + jnp.dot(wr_ref[...], xd_s[:, PAD:PAD + L],
                        preferred_element_type=jnp.float32)
        y = _leaky(y).astype(o_ref.dtype)  # (Cout, L) bf16

        # Lane-dense (Cout, HW) stores, one per image of the block.
        for n in range(NB):
            o_ref[n] = y[:, n * HW:(n + 1) * HW]

    return kernel


def prepare_residual_conv_params(w1_oihw, w2_oihw, wr_oihw=None, dtype=jnp.bfloat16):
    """One-time weight repack: OIHW -> tap-major (9, O, I), cast to bf16.

    Call once at model setup so per-invocation forward passes do no weight
    transposes/casts."""
    Cout, Cin = int(w1_oihw.shape[0]), int(w1_oihw.shape[1])
    w1 = jnp.transpose(w1_oihw, (2, 3, 0, 1)).reshape(9, Cout, Cin).astype(dtype)
    w2 = jnp.transpose(w2_oihw, (2, 3, 0, 1)).reshape(9, Cout, Cout).astype(dtype)
    if wr_oihw is None:
        assert Cin == Cout, "identity residual requires nin == nout"
        wr = jnp.eye(Cout, dtype=dtype)
    else:
        wr = wr_oihw[:, :, 0, 0].astype(dtype)
    return w1, w2, wr


def residual_conv_forward(x_nchw, params, batch_block=None):
    """ResidualConv forward.  x is PyTorch NCHW; params from prepare_residual_conv_params."""
    w1, w2, wr = params
    N, Cin, H, W = x_nchw.shape
    Cout = int(w1.shape[1])
    HW = H * W
    PAD = W + 1
    cdt = w1.dtype

    if batch_block is None:
        # Small blocks keep grid >= 2 (software pipelining + v7x dual-TC sharding)
        # while fusing a few images onto the lane axis to widen each matmul.
        batch_block = 1
        for cand in (4, 2):
            if N % cand == 0 and N // cand >= 2:
                batch_block = cand
                break
    NB = batch_block
    assert N % NB == 0
    L = NB * HW
    # TODO(synk): for production H*W / channel counts, tile H*W into lane-aligned
    # strips with a one-row halo; budget strips against v7x's 64 MiB VMEM and set
    # pltpu.CompilerParams(vmem_limit_bytes=...) explicitly.

    # NCHW -> (N, C, H*W): pure reshape (no transpose); H*W rides the lane axis.
    x = x_nchw.reshape(N, Cin, HW).astype(cdt)

    # SAME-padding validity masks for the 8 off-center taps, tiled over the
    # lane-concatenated batch block.  Precomputed host-side so the kernel does
    # one vmul per tap instead of compares + selects every grid step.
    r = jnp.arange(HW, dtype=jnp.int32) // W
    c = jnp.arange(HW, dtype=jnp.int32) % W
    mrows = []
    for oy, ox in _OFFS:
        if (oy, ox) == (0, 0):
            continue
        ok = (r + oy >= 0) & (r + oy < H) & (c + ox >= 0) & (c + ox < W)
        mrows.append(ok)
    masks = jnp.tile(jnp.stack(mrows).astype(cdt), (1, NB))  # (8, L)

    kernel = _make_kernel(H, W, NB, Cin, Cout, cdt)

    out = pl.pallas_call(
        kernel,
        out_shape=jax.ShapeDtypeStruct((N, Cout, HW), cdt),  # bf16 output stream
        grid_spec=pltpu.PrefetchScalarGridSpec(
            num_scalar_prefetch=0,
            grid=(N // NB,),
            in_specs=[
                pl.BlockSpec((NB, Cin, HW), lambda b: (b, 0, 0)),
                pl.BlockSpec((9, Cout, Cin), lambda b: (0, 0, 0)),
                pl.BlockSpec((9, Cout, Cout), lambda b: (0, 0, 0)),
                pl.BlockSpec((Cout, Cin), lambda b: (0, 0)),
                pl.BlockSpec((8, L), lambda b: (0, 0)),
            ],
            out_specs=pl.BlockSpec((NB, Cout, HW), lambda b: (b, 0, 0)),
            scratch_shapes=[
                pltpu.VMEM((Cin, L + 2 * PAD), cdt),
                pltpu.VMEM((Cout, L + 2 * PAD), cdt),
            ],
        ),
        compiler_params=pltpu.CompilerParams(
            dimension_semantics=("parallel",)),
    )(x, w1, w2, wr, masks)

    # (N, Cout, H*W) -> NCHW: pure reshape, no output transpose needed.
    return out.reshape(N, Cout, H, W)


def _reference_forward(x, w1, w2, wr):
    """Pure-JAX reference mirroring the PyTorch module (NCHW / OIHW, f32 HIGHEST)."""
    dn = ("NCHW", "OIHW", "NCHW")
    prec = jax.lax.Precision.HIGHEST

    def cconv(lhs, rhs):
        return jax.lax.conv_general_dilated(
            lhs, rhs, (1, 1), "SAME", dimension_numbers=dn, precision=prec)

    h = cconv(x, w1)
    h = jnp.where(h > 0, h, NEG_SLOPE * h)
    h = cconv(h, w2)
    o = h + cconv(x, wr)
    return jnp.where(o > 0, o, NEG_SLOPE * o)


if __name__ == "__main__":
    # Small shapes implied by the module: nin != nout exercises the 1x1 res conv.
    N, Cin, Cout, H, W = 2, 4, 8, 16, 16

    key = jax.random.PRNGKey(0)
    k1, k2, k3, k4 = jax.random.split(key, 4)
    x = jax.random.normal(k1, (N, Cin, H, W), jnp.float32)
    w1 = jax.random.normal(k2, (Cout, Cin, 3, 3), jnp.float32) * 0.1   # conv1 (no bias)
    w2 = jax.random.normal(k3, (Cout, Cout, 3, 3), jnp.float32) * 0.1  # conv2 (no bias)
    wr = jax.random.normal(k4, (Cout, Cin, 1, 1), jnp.float32) * 0.1   # residual 1x1

    params = prepare_residual_conv_params(w1, w2, wr)  # once, at "model setup"
    out = jax.block_until_ready(residual_conv_forward(x, params))

    ref = _reference_forward(x, w1, w2, wr)
    assert out.shape == ref.shape == (N, Cout, H, W)
    max_err = float(jnp.max(jnp.abs(out.astype(jnp.float32) - ref)))
    # bf16 activations/weights/output with f32 accumulation vs pure-f32 HIGHEST ref.
    assert max_err < 7.5e-2, f"max abs err {max_err}"

    print("KERNEL_OK")
</pallas_src>

<mosaic_0001>
module attributes {stable_mosaic.version = 11 : i64} {
  func.func @kernel(%arg0: i32, %arg1: memref<1x4x256xbf16, #tpu.memory_space<vmem>>, %arg2: memref<9x8x4xbf16, #tpu.memory_space<vmem>>, %arg3: memref<9x8x8xbf16, #tpu.memory_space<vmem>>, %arg4: memref<8x4xbf16, #tpu.memory_space<vmem>>, %arg5: memref<8x256xbf16, #tpu.memory_space<vmem>>, %arg6: memref<1x8x256xbf16, #tpu.memory_space<vmem>>, %arg7: memref<4x290xbf16, #tpu.memory_space<vmem>>, %arg8: memref<8x290xbf16, #tpu.memory_space<vmem>>) attributes {dimension_semantics = [#tpu.dimension_semantics<parallel>], iteration_bounds = array<i64: 2>, scalar_prefetch = 0 : i64, scratch_operands = 2 : i64, tpu.core_type = #tpu.core_type<tc>, window_params = [{transform_indices = @transform_0, window_bounds = array<i64: 1, 4, 256>}, {pipeline_mode = #tpu.pipeline_mode<synchronous>, transform_indices = @transform_1, window_bounds = array<i64: 9, 8, 4>}, {pipeline_mode = #tpu.pipeline_mode<synchronous>, transform_indices = @transform_2, window_bounds = array<i64: 9, 8, 8>}, {pipeline_mode = #tpu.pipeline_mode<synchronous>, transform_indices = @transform_3, window_bounds = array<i64: 8, 4>}, {pipeline_mode = #tpu.pipeline_mode<synchronous>, transform_indices = @transform_4, window_bounds = array<i64: 8, 256>}, {transform_indices = @transform_5, window_bounds = array<i64: 1, 8, 256>}]} {
    %cst = arith.constant 0.000000e+00 : bf16
    %0 = vector.broadcast %cst : bf16 to vector<4x17xbf16>
    %c0 = arith.constant 0 : index
    %c0_0 = arith.constant 0 : index
    %1 = vector.load %arg7[%c0, %c0_0] : memref<4x290xbf16, #tpu.memory_space<vmem>>, vector<4x17xbf16>
    tpu.vector_store %arg7[%c0, %c0_0], %0 {strides = array<i32>} : memref<4x290xbf16, #tpu.memory_space<vmem>>, vector<4x17xbf16>,
    %cst_1 = arith.constant 0.000000e+00 : bf16
    %2 = vector.broadcast %cst_1 : bf16 to vector<4x17xbf16>
    %c0_2 = arith.constant 0 : index
    %c273 = arith.constant 273 : index
    %3 = vector.load %arg7[%c0_2, %c273] : memref<4x290xbf16, #tpu.memory_space<vmem>>, vector<4x17xbf16>
    tpu.vector_store %arg7[%c0_2, %c273], %2 {strides = array<i32>} : memref<4x290xbf16, #tpu.memory_space<vmem>>, vector<4x17xbf16>,
    %cst_3 = arith.constant 0.000000e+00 : bf16
    %4 = vector.broadcast %cst_3 : bf16 to vector<8x17xbf16>
    %c0_4 = arith.constant 0 : index
    %c0_5 = arith.constant 0 : index
    %5 = vector.load %arg8[%c0_4, %c0_5] : memref<8x290xbf16, #tpu.memory_space<vmem>>, vector<8x17xbf16>
    tpu.vector_store %arg8[%c0_4, %c0_5], %4 {strides = array<i32>} : memref<8x290xbf16, #tpu.memory_space<vmem>>, vector<8x17xbf16>,
    %cst_6 = arith.constant 0.000000e+00 : bf16
    %6 = vector.broadcast %cst_6 : bf16 to vector<8x17xbf16>
    %c0_7 = arith.constant 0 : index
    %c273_8 = arith.constant 273 : index
    %7 = vector.load %arg8[%c0_7, %c273_8] : memref<8x290xbf16, #tpu.memory_space<vmem>>, vector<8x17xbf16>
    tpu.vector_store %arg8[%c0_7, %c273_8], %6 {strides = array<i32>} : memref<8x290xbf16, #tpu.memory_space<vmem>>, vector<8x17xbf16>,
    %c0_9 = arith.constant 0 : index
    %c0_10 = arith.constant 0 : index
    %c0_11 = arith.constant 0 : index
    %8 = vector.load %arg1[%c0_9, %c0_10, %c0_11] : memref<1x4x256xbf16, #tpu.memory_space<vmem>>, vector<1x4x256xbf16>
    %9 = vector.shape_cast %8 : vector<1x4x256xbf16> to vector<4x256xbf16>
    %c0_12 = arith.constant 0 : index
    %c17 = arith.constant 17 : index
    %10 = vector.load %arg7[%c0_12, %c17] : memref<4x290xbf16, #tpu.memory_space<vmem>>, vector<4x256xbf16>
    tpu.vector_store %arg7[%c0_12, %c17], %9 {strides = array<i32>} : memref<4x290xbf16, #tpu.memory_space<vmem>>, vector<4x256xbf16>,
    %c0_13 = arith.constant 0 : index
    %c0_14 = arith.constant 0 : index
    %11 = vector.load %arg5[%c0_13, %c0_14] : memref<8x256xbf16, #tpu.memory_space<vmem>>, vector<8x256xbf16>
    %c0_15 = arith.constant 0 : index
    %c0_16 = arith.constant 0 : index
    %12 = vector.load %arg7[%c0_15, %c0_16] : memref<4x290xbf16, #tpu.memory_space<vmem>>, vector<4x256xbf16>
    %13 = vector.extract_strided_slice %11 {offsets = [0, 0], sizes = [1, 256], strides = [1, 1]} : vector<8x256xbf16> to vector<1x256xbf16>
    %14 = vector.broadcast %13 : vector<1x256xbf16> to vector<4x256xbf16>
    %15 = arith.mulf %12, %14 : vector<4x256xbf16>
    %c0_17 = arith.constant 0 : index
    %c0_18 = arith.constant 0 : index
    %c0_19 = arith.constant 0 : index
    %16 = vector.load %arg2[%c0_17, %c0_18, %c0_19] : memref<9x8x4xbf16, #tpu.memory_space<vmem>>, vector<1x8x4xbf16>
    %17 = vector.shape_cast %16 : vector<1x8x4xbf16> to vector<8x4xbf16>
    %cst_20 = arith.constant dense<0.000000e+00> : vector<8x256xf32>
    %18 = tpu.matmul %17, %15, %cst_20 {dimension_numbers = #tpu.dot_dimension_numbers<[1], [0], [0], [1], [0, 0, 1, 1], [], []>} : vector<8x4xbf16>, vector<4x256xbf16>, vector<8x256xf32> -> vector<8x256xf32>
    %c0_21 = arith.constant 0 : index
    %c1 = arith.constant 1 : index
    %19 = vector.load %arg7[%c0_21, %c1] : memref<4x290xbf16, #tpu.memory_space<vmem>>, vector<4x256xbf16>
    %20 = vector.extract_strided_slice %11 {offsets = [1, 0], sizes = [1, 256], strides = [1, 1]} : vector<8x256xbf16> to vector<1x256xbf16>
    %21 = vector.broadcast %20 : vector<1x256xbf16> to vector<4x256xbf16>
    %22 = arith.mulf %19, %21 : vector<4x256xbf16>
    %c1_22 = arith.constant 1 : index
    %c0_23 = arith.constant 0 : index
    %c0_24 = arith.constant 0 : index
    %23 = vector.load %arg2[%c1_22, %c0_23, %c0_24] : memref<9x8x4xbf16, #tpu.memory_space<vmem>>, vector<1x8x4xbf16>
    %24 = vector.shape_cast %23 : vector<1x8x4xbf16> to vector<8x4xbf16>
    %cst_25 = arith.constant dense<0.000000e+00> : vector<8x256xf32>
    %25 = tpu.matmul %24, %22, %cst_25 {dimension_numbers = #tpu.dot_dimension_numbers<[1], [0], [0], [1], [0, 0, 1, 1], [], []>} : vector<8x4xbf16>, vector<4x256xbf16>, vector<8x256xf32> -> vector<8x256xf32>
    %26 = arith.addf %18, %25 : vector<8x256xf32>
    %c0_26 = arith.constant 0 : index
    %c2 = arith.constant 2 : index
    %27 = vector.load %arg7[%c0_26, %c2] : memref<4x290xbf16, #tpu.memory_space<vmem>>, vector<4x256xbf16>
    %28 = vector.extract_strided_slice %11 {offsets = [2, 0], sizes = [1, 256], strides = [1, 1]} : vector<8x256xbf16> to vector<1x256xbf16>
    %29 = vector.broadcast %28 : vector<1x256xbf16> to vector<4x256xbf16>
    %30 = arith.mulf %27, %29 : vector<4x256xbf16>
    %c2_27 = arith.constant 2 : index
    %c0_28 = arith.constant 0 : index
    %c0_29 = arith.constant 0 : index
    %31 = vector.load %arg2[%c2_27, %c0_28, %c0_29] : memref<9x8x4xbf16, #tpu.memory_space<vmem>>, vector<1x8x4xbf16>
    %32 = vector.shape_cast %31 : vector<1x8x4xbf16> to vector<8x4xbf16>
    %cst_30 = arith.constant dense<0.000000e+00> : vector<8x256xf32>
    %33 = tpu.matmul %32, %30, %cst_30 {dimension_numbers = #tpu.dot_dimension_numbers<[1], [0], [0], [1], [0, 0, 1, 1], [], []>} : vector<8x4xbf16>, vector<4x256xbf16>, vector<8x256xf32> -> vector<8x256xf32>
    %34 = arith.addf %26, %33 : vector<8x256xf32>
    %c0_31 = arith.constant 0 : index
    %c16 = arith.constant 16 : index
    %35 = vector.load %arg7[%c0_31, %c16] : memref<4x290xbf16, #tpu.memory_space<vmem>>, vector<4x256xbf16>
    %36 = vector.extract_strided_slice %11 {offsets = [3, 0], sizes = [1, 256], strides = [1, 1]} : vector<8x256xbf16> to vector<1x256xbf16>
    %37 = vector.broadcast %36 : vector<1x256xbf16> to vector<4x256xbf16>
    %38 = arith.mulf %35, %37 : vector<4x256xbf16>
    %c3 = arith.constant 3 : index
    %c0_32 = arith.constant 0 : index
    %c0_33 = arith.constant 0 : index
    %39 = vector.load %arg2[%c3, %c0_32, %c0_33] : memref<9x8x4xbf16, #tpu.memory_space<vmem>>, vector<1x8x4xbf16>
    %40 = vector.shape_cast %39 : vector<1x8x4xbf16> to vector<8x4xbf16>
    %cst_34 = arith.constant dense<0.000000e+00> : vector<8x256xf32>
    %41 = tpu.matmul %40, %38, %cst_34 {dimension_numbers = #tpu.dot_dimension_numbers<[1], [0], [0], [1], [0, 0, 1, 1], [], []>} : vector<8x4xbf16>, vector<4x256xbf16>, vector<8x256xf32> -> vector<8x256xf32>
    %42 = arith.addf %34, %41 : vector<8x256xf32>
    %c0_35 = arith.constant 0 : index
    %c17_36 = arith.constant 17 : index
    %43 = vector.load %arg7[%c0_35, %c17_36] : memref<4x290xbf16, #tpu.memory_space<vmem>>, vector<4x256xbf16>
    %c4 = arith.constant 4 : index
    %c0_37 = arith.constant 0 : index
    %c0_38 = arith.constant 0 : index
    %44 = vector.load %arg2[%c4, %c0_37, %c0_38] : memref<9x8x4xbf16, #tpu.memory_space<vmem>>, vector<1x8x4xbf16>
    %45 = vector.shape_cast %44 : vector<1x8x4xbf16> to vector<8x4xbf16>
    %cst_39 = arith.constant dense<0.000000e+00> : vector<8x256xf32>
    %46 = tpu.matmul %45, %43, %cst_39 {dimension_numbers = #tpu.dot_dimension_numbers<[1], [0], [0], [1], [0, 0, 1, 1], [], []>} : vector<8x4xbf16>, vector<4x256xbf16>, vector<8x256xf32> -> vector<8x256xf32>
    %47 = arith.addf %42, %46 : vector<8x256xf32>
    %c0_40 = arith.constant 0 : index
    %c18 = arith.constant 18 : index
    %48 = vector.load %arg7[%c0_40, %c18] : memref<4x290xbf16, #tpu.memory_space<vmem>>, vector<4x256xbf16>
    %49 = vector.extract_strided_slice %11 {offsets = [4, 0], sizes = [1, 256], strides = [1, 1]} : vector<8x256xbf16> to vector<1x256xbf16>
    %50 = vector.broadcast %49 : vector<1x256xbf16> to vector<4x256xbf16>
    %51 = arith.mulf %48, %50 : vector<4x256xbf16>
    %c5 = arith.constant 5 : index
    %c0_41 = arith.constant 0 : index
    %c0_42 = arith.constant 0 : index
    %52 = vector.load %arg2[%c5, %c0_41, %c0_42] : memref<9x8x4xbf16, #tpu.memory_space<vmem>>, vector<1x8x4xbf16>
    %53 = vector.shape_cast %52 : vector<1x8x4xbf16> to vector<8x4xbf16>
    %cst_43 = arith.constant dense<0.000000e+00> : vector<8x256xf32>
    %54 = tpu.matmul %53, %51, %cst_43 {dimension_numbers = #tpu.dot_dimension_numbers<[1], [0], [0], [1], [0, 0, 1, 1], [], []>} : vector<8x4xbf16>, vector<4x256xbf16>, vector<8x256xf32> -> vector<8x256xf32>
    %55 = arith.addf %47, %54 : vector<8x256xf32>
    %c0_44 = arith.constant 0 : index
    %c32 = arith.constant 32 : index
    %56 = vector.load %arg7[%c0_44, %c32] : memref<4x290xbf16, #tpu.memory_space<vmem>>, vector<4x256xbf16>
    %57 = vector.extract_strided_slice %11 {offsets = [5, 0], sizes = [1, 256], strides = [1, 1]} : vector<8x256xbf16> to vector<1x256xbf16>
    %58 = vector.broadcast %57 : vector<1x256xbf16> to vector<4x256xbf16>
    %59 = arith.mulf %56, %58 : vector<4x256xbf16>
    %c6 = arith.constant 6 : index
    %c0_45 = arith.constant 0 : index
    %c0_46 = arith.constant 0 : index
    %60 = vector.load %arg2[%c6, %c0_45, %c0_46] : memref<9x8x4xbf16, #tpu.memory_space<vmem>>, vector<1x8x4xbf16>
    %61 = vector.shape_cast %60 : vector<1x8x4xbf16> to vector<8x4xbf16>
    %cst_47 = arith.constant dense<0.000000e+00> : vector<8x256xf32>
    %62 = tpu.matmul %61, %59, %cst_47 {dimension_numbers = #tpu.dot_dimension_numbers<[1], [0], [0], [1], [0, 0, 1, 1], [], []>} : vector<8x4xbf16>, vector<4x256xbf16>, vector<8x256xf32> -> vector<8x256xf32>
    %63 = arith.addf %55, %62 : vector<8x256xf32>
    %c0_48 = arith.constant 0 : index
    %c33 = arith.constant 33 : index
    %64 = vector.load %arg7[%c0_48, %c33] : memref<4x290xbf16, #tpu.memory_space<vmem>>, vector<4x256xbf16>
    %65 = vector.extract_strided_slice %11 {offsets = [6, 0], sizes = [1, 256], strides = [1, 1]} : vector<8x256xbf16> to vector<1x256xbf16>
    %66 = vector.broadcast %65 : vector<1x256xbf16> to vector<4x256xbf16>
    %67 = arith.mulf %64, %66 : vector<4x256xbf16>
    %c7 = arith.constant 7 : index
    %c0_49 = arith.constant 0 : index
    %c0_50 = arith.constant 0 : index
    %68 = vector.load %arg2[%c7, %c0_49, %c0_50] : memref<9x8x4xbf16, #tpu.memory_space<vmem>>, vector<1x8x4xbf16>
    %69 = vector.shape_cast %68 : vector<1x8x4xbf16> to vector<8x4xbf16>
    %cst_51 = arith.constant dense<0.000000e+00> : vector<8x256xf32>
    %70 = tpu.matmul %69, %67, %cst_51 {dimension_numbers = #tpu.dot_dimension_numbers<[1], [0], [0], [1], [0, 0, 1, 1], [], []>} : vector<8x4xbf16>, vector<4x256xbf16>, vector<8x256xf32> -> vector<8x256xf32>
    %71 = arith.addf %63, %70 : vector<8x256xf32>
    %c0_52 = arith.constant 0 : index
    %c34 = arith.constant 34 : index
    %72 = vector.load %arg7[%c0_52, %c34] : memref<4x290xbf16, #tpu.memory_space<vmem>>, vector<4x256xbf16>
    %73 = vector.extract_strided_slice %11 {offsets = [7, 0], sizes = [1, 256], strides = [1, 1]} : vector<8x256xbf16> to vector<1x256xbf16>
    %74 = vector.broadcast %73 : vector<1x256xbf16> to vector<4x256xbf16>
    %75 = arith.mulf %72, %74 : vector<4x256xbf16>
    %c8 = arith.constant 8 : index
    %c0_53 = arith.constant 0 : index
    %c0_54 = arith.constant 0 : index
    %76 = vector.load %arg2[%c8, %c0_53, %c0_54] : memref<9x8x4xbf16, #tpu.memory_space<vmem>>, vector<1x8x4xbf16>
    %77 = vector.shape_cast %76 : vector<1x8x4xbf16> to vector<8x4xbf16>
    %cst_55 = arith.constant dense<0.000000e+00> : vector<8x256xf32>
    %78 = tpu.matmul %77, %75, %cst_55 {dimension_numbers = #tpu.dot_dimension_numbers<[1], [0], [0], [1], [0, 0, 1, 1], [], []>} : vector<8x4xbf16>, vector<4x256xbf16>, vector<8x256xf32> -> vector<8x256xf32>
    %79 = arith.addf %71, %78 : vector<8x256xf32>
    %cst_56 = arith.constant 0.000000e+00 : f32
    %80 = vector.broadcast %cst_56 : f32 to vector<8x256xf32>
    %81 = arith.cmpf ogt, %79, %80 : vector<8x256xf32>
    %cst_57 = arith.constant 2.000000e-01 : f32
    %82 = vector.broadcast %cst_57 : f32 to vector<8x256xf32>
    %83 = arith.mulf %82, %79 : vector<8x256xf32>
    %84 = arith.select %81, %79, %83 : vector<8x256xi1>, vector<8x256xf32>
    %85 = arith.truncf %84 : vector<8x256xf32> to vector<8x256xbf16>
    %c0_58 = arith.constant 0 : index
    %c17_59 = arith.constant 17 : index
    %86 = vector.load %arg8[%c0_58, %c17_59] : memref<8x290xbf16, #tpu.memory_space<vmem>>, vector<8x256xbf16>
    tpu.vector_store %arg8[%c0_58, %c17_59], %85 {strides = array<i32>} : memref<8x290xbf16, #tpu.memory_space<vmem>>, vector<8x256xbf16>,
    %c0_60 = arith.constant 0 : index
    %c0_61 = arith.constant 0 : index
    %87 = vector.load %arg8[%c0_60, %c0_61] : memref<8x290xbf16, #tpu.memory_space<vmem>>, vector<8x256xbf16>
    %88 = vector.extract_strided_slice %11 {offsets = [0, 0], sizes = [1, 256], strides = [1, 1]} : vector<8x256xbf16> to vector<1x256xbf16>
    %89 = vector.broadcast %88 : vector<1x256xbf16> to vector<8x256xbf16>
    %90 = arith.mulf %87, %89 : vector<8x256xbf16>
    %c0_62 = arith.constant 0 : index
    %c0_63 = arith.constant 0 : index
    %c0_64 = arith.constant 0 : index
    %91 = vector.load %arg3[%c0_62, %c0_63, %c0_64] : memref<9x8x8xbf16, #tpu.memory_space<vmem>>, vector<1x8x8xbf16>
    %92 = vector.shape_cast %91 : vector<1x8x8xbf16> to vector<8x8xbf16>
    %cst_65 = arith.constant dense<0.000000e+00> : vector<8x256xf32>
    %93 = tpu.matmul %92, %90, %cst_65 {dimension_numbers = #tpu.dot_dimension_numbers<[1], [0], [0], [1], [0, 0, 1, 1], [], []>} : vector<8x8xbf16>, vector<8x256xbf16>, vector<8x256xf32> -> vector<8x256xf32>
    %c0_66 = arith.constant 0 : index
    %c1_67 = arith.constant 1 : index
    %94 = vector.load %arg8[%c0_66, %c1_67] : memref<8x290xbf16, #tpu.memory_space<vmem>>, vector<8x256xbf16>
    %95 = vector.extract_strided_slice %11 {offsets = [1, 0], sizes = [1, 256], strides = [1, 1]} : vector<8x256xbf16> to vector<1x256xbf16>
    %96 = vector.broadcast %95 : vector<1x256xbf16> to vector<8x256xbf16>
    %97 = arith.mulf %94, %96 : vector<8x256xbf16>
    %c1_68 = arith.constant 1 : index
    %c0_69 = arith.constant 0 : index
    %c0_70 = arith.constant 0 : index
    %98 = vector.load %arg3[%c1_68, %c0_69, %c0_70] : memref<9x8x8xbf16, #tpu.memory_space<vmem>>, vector<1x8x8xbf16>
    %99 = vector.shape_cast %98 : vector<1x8x8xbf16> to vector<8x8xbf16>
    %cst_71 = arith.constant dense<0.000000e+00> : vector<8x256xf32>
    %100 = tpu.matmul %99, %97, %cst_71 {dimension_numbers = #tpu.dot_dimension_numbers<[1], [0], [0], [1], [0, 0, 1, 1], [], []>} : vector<8x8xbf16>, vector<8x256xbf16>, vector<8x256xf32> -> vector<8x256xf32>
    %101 = arith.addf %93, %100 : vector<8x256xf32>
    %c0_72 = arith.constant 0 : index
    %c2_73 = arith.constant 2 : index
    %102 = vector.load %arg8[%c0_72, %c2_73] : memref<8x290xbf16, #tpu.memory_space<vmem>>, vector<8x256xbf16>
    %103 = vector.extract_strided_slice %11 {offsets = [2, 0], sizes = [1, 256], strides = [1, 1]} : vector<8x256xbf16> to vector<1x256xbf16>
    %104 = vector.broadcast %103 : vector<1x256xbf16> to vector<8x256xbf16>
    %105 = arith.mulf %102, %104 : vector<8x256xbf16>
    %c2_74 = arith.constant 2 : index
    %c0_75 = arith.constant 0 : index
    %c0_76 = arith.constant 0 : index
    %106 = vector.load %arg3[%c2_74, %c0_75, %c0_76] : memref<9x8x8xbf16, #tpu.memory_space<vmem>>, vector<1x8x8xbf16>
    %107 = vector.shape_cast %106 : vector<1x8x8xbf16> to vector<8x8xbf16>
    %cst_77 = arith.constant dense<0.000000e+00> : vector<8x256xf32>
    %108 = tpu.matmul %107, %105, %cst_77 {dimension_numbers = #tpu.dot_dimension_numbers<[1], [0], [0], [1], [0, 0, 1, 1], [], []>} : vector<8x8xbf16>, vector<8x256xbf16>, vector<8x256xf32> -> vector<8x256xf32>
    %109 = arith.addf %101, %108 : vector<8x256xf32>
    %c0_78 = arith.constant 0 : index
    %c16_79 = arith.constant 16 : index
    %110 = vector.load %arg8[%c0_78, %c16_79] : memref<8x290xbf16, #tpu.memory_space<vmem>>, vector<8x256xbf16>
    %111 = vector.extract_strided_slice %11 {offsets = [3, 0], sizes = [1, 256], strides = [1, 1]} : vector<8x256xbf16> to vector<1x256xbf16>
    %112 = vector.broadcast %111 : vector<1x256xbf16> to vector<8x256xbf16>
    %113 = arith.mulf %110, %112 : vector<8x256xbf16>
    %c3_80 = arith.constant 3 : index
    %c0_81 = arith.constant 0 : index
    %c0_82 = arith.constant 0 : index
    %114 = vector.load %arg3[%c3_80, %c0_81, %c0_82] : memref<9x8x8xbf16, #tpu.memory_space<vmem>>, vector<1x8x8xbf16>
    %115 = vector.shape_cast %114 : vector<1x8x8xbf16> to vector<8x8xbf16>
    %cst_83 = arith.constant dense<0.000000e+00> : vector<8x256xf32>
    %116 = tpu.matmul %115, %113, %cst_83 {dimension_numbers = #tpu.dot_dimension_numbers<[1], [0], [0], [1], [0, 0, 1, 1], [], []>} : vector<8x8xbf16>, vector<8x256xbf16>, vector<8x256xf32> -> vector<8x256xf32>
    %117 = arith.addf %109, %116 : vector<8x256xf32>
    %c0_84 = arith.constant 0 : index
    %c17_85 = arith.constant 17 : index
    %118 = vector.load %arg8[%c0_84, %c17_85] : memref<8x290xbf16, #tpu.memory_space<vmem>>, vector<8x256xbf16>
    %c4_86 = arith.constant 4 : index
    %c0_87 = arith.constant 0 : index
    %c0_88 = arith.constant 0 : index
    %119 = vector.load %arg3[%c4_86, %c0_87, %c0_88] : memref<9x8x8xbf16, #tpu.memory_space<vmem>>, vector<1x8x8xbf16>
    %120 = vector.shape_cast %119 : vector<1x8x8xbf16> to vector<8x8xbf16>
    %cst_89 = arith.constant dense<0.000000e+00> : vector<8x256xf32>
    %121 = tpu.matmul %120, %118, %cst_89 {dimension_numbers = #tpu.dot_dimension_numbers<[1], [0], [0], [1], [0, 0, 1, 1], [], []>} : vector<8x8xbf16>, vector<8x256xbf16>, vector<8x256xf32> -> vector<8x256xf32>
    %122 = arith.addf %117, %121 : vector<8x256xf32>
    %c0_90 = arith.constant 0 : index
    %c18_91 = arith.constant 18 : index
    %123 = vector.load %arg8[%c0_90, %c18_91] : memref<8x290xbf16, #tpu.memory_space<vmem>>, vector<8x256xbf16>
    %124 = vector.extract_strided_slice %11 {offsets = [4, 0], sizes = [1, 256], strides = [1, 1]} : vector<8x256xbf16> to vector<1x256xbf16>
    %125 = vector.broadcast %124 : vector<1x256xbf16> to vector<8x256xbf16>
    %126 = arith.mulf %123, %125 : vector<8x256xbf16>
    %c5_92 = arith.constant 5 : index
    %c0_93 = arith.constant 0 : index
    %c0_94 = arith.constant 0 : index
    %127 = vector.load %arg3[%c5_92, %c0_93, %c0_94] : memref<9x8x8xbf16, #tpu.memory_space<vmem>>, vector<1x8x8xbf16>
    %128 = vector.shape_cast %127 : vector<1x8x8xbf16> to vector<8x8xbf16>
    %cst_95 = arith.constant dense<0.000000e+00> : vector<8x256xf32>
    %129 = tpu.matmul %128, %126, %cst_95 {dimension_numbers = #tpu.dot_dimension_numbers<[1], [0], [0], [1], [0, 0, 1, 1], [], []>} : vector<8x8xbf16>, vector<8x256xbf16>, vector<8x256xf32> -> vector<8x256xf32>
    %130 = arith.addf %122, %129 : vector<8x256xf32>
    %c0_96 = arith.constant 0 : index
    %c32_97 = arith.constant 32 : index
    %131 = vector.load %arg8[%c0_96, %c32_97] : memref<8x290xbf16, #tpu.memory_space<vmem>>, vector<8x256xbf16>
    %132 = vector.extract_strided_slice %11 {offsets = [5, 0], sizes = [1, 256], strides = [1, 1]} : vector<8x256xbf16> to vector<1x256xbf16>
    %133 = vector.broadcast %132 : vector<1x256xbf16> to vector<8x256xbf16>
    %134 = arith.mulf %131, %133 : vector<8x256xbf16>
    %c6_98 = arith.constant 6 : index
    %c0_99 = arith.constant 0 : index
    %c0_100 = arith.constant 0 : index
    %135 = vector.load %arg3[%c6_98, %c0_99, %c0_100] : memref<9x8x8xbf16, #tpu.memory_space<vmem>>, vector<1x8x8xbf16>
    %136 = vector.shape_cast %135 : vector<1x8x8xbf16> to vector<8x8xbf16>
    %cst_101 = arith.constant dense<0.000000e+00> : vector<8x256xf32>
    %137 = tpu.matmul %136, %134, %cst_101 {dimension_numbers = #tpu.dot_dimension_numbers<[1], [0], [0], [1], [0, 0, 1, 1], [], []>} : vector<8x8xbf16>, vector<8x256xbf16>, vector<8x256xf32> -> vector<8x256xf32>
    %138 = arith.addf %130, %137 : vector<8x256xf32>
    %c0_102 = arith.constant 0 : index
    %c33_103 = arith.constant 33 : index
    %139 = vector.load %arg8[%c0_102, %c33_103] : memref<8x290xbf16, #tpu.memory_space<vmem>>, vector<8x256xbf16>
    %140 = vector.extract_strided_slice %11 {offsets = [6, 0], sizes = [1, 256], strides = [1, 1]} : vector<8x256xbf16> to vector<1x256xbf16>
    %141 = vector.broadcast %140 : vector<1x256xbf16> to vector<8x256xbf16>
    %142 = arith.mulf %139, %141 : vector<8x256xbf16>
    %c7_104 = arith.constant 7 : index
    %c0_105 = arith.constant 0 : index
    %c0_106 = arith.constant 0 : index
    %143 = vector.load %arg3[%c7_104, %c0_105, %c0_106] : memref<9x8x8xbf16, #tpu.memory_space<vmem>>, vector<1x8x8xbf16>
    %144 = vector.shape_cast %143 : vector<1x8x8xbf16> to vector<8x8xbf16>
    %cst_107 = arith.constant dense<0.000000e+00> : vector<8x256xf32>
    %145 = tpu.matmul %144, %142, %cst_107 {dimension_numbers = #tpu.dot_dimension_numbers<[1], [0], [0], [1], [0, 0, 1, 1], [], []>} : vector<8x8xbf16>, vector<8x256xbf16>, vector<8x256xf32> -> vector<8x256xf32>
    %146 = arith.addf %138, %145 : vector<8x256xf32>
    %c0_108 = arith.constant 0 : index
    %c34_109 = arith.constant 34 : index
    %147 = vector.load %arg8[%c0_108, %c34_109] : memref<8x290xbf16, #tpu.memory_space<vmem>>, vector<8x256xbf16>
    %148 = vector.extract_strided_slice %11 {offsets = [7, 0], sizes = [1, 256], strides = [1, 1]} : vector<8x256xbf16> to vector<1x256xbf16>
    %149 = vector.broadcast %148 : vector<1x256xbf16> to vector<8x256xbf16>
    %150 = arith.mulf %147, %149 : vector<8x256xbf16>
    %c8_110 = arith.constant 8 : index
    %c0_111 = arith.constant 0 : index
    %c0_112 = arith.constant 0 : index
    %151 = vector.load %arg3[%c8_110, %c0_111, %c0_112] : memref<9x8x8xbf16, #tpu.memory_space<vmem>>, vector<1x8x8xbf16>
    %152 = vector.shape_cast %151 : vector<1x8x8xbf16> to vector<8x8xbf16>
    %cst_113 = arith.constant dense<0.000000e+00> : vector<8x256xf32>
    %153 = tpu.matmul %152, %150, %cst_113 {dimension_numbers = #tpu.dot_dimension_numbers<[1], [0], [0], [1], [0, 0, 1, 1], [], []>} : vector<8x8xbf16>, vector<8x256xbf16>, vector<8x256xf32> -> vector<8x256xf32>
    %154 = arith.addf %146, %153 : vector<8x256xf32>
    %c0_114 = arith.constant 0 : index
    %c0_115 = arith.constant 0 : index
    %155 = vector.load %arg4[%c0_114, %c0_115] : memref<8x4xbf16, #tpu.memory_space<vmem>>, vector<8x4xbf16>
    %c0_116 = arith.constant 0 : index
    %c17_117 = arith.constant 17 : index
    %156 = vector.load %arg7[%c0_116, %c17_117] : memref<4x290xbf16, #tpu.memory_space<vmem>>, vector<4x256xbf16>
    %cst_118 = arith.constant dense<0.000000e+00> : vector<8x256xf32>
    %157 = tpu.matmul %155, %156, %cst_118 {dimension_numbers = #tpu.dot_dimension_numbers<[1], [0], [0], [1], [0, 0, 1, 1], [], []>} : vector<8x4xbf16>, vector<4x256xbf16>, vector<8x256xf32> -> vector<8x256xf32>
    %158 = arith.addf %154, %157 : vector<8x256xf32>
    %cst_119 = arith.constant 0.000000e+00 : f32
    %159 = vector.broadcast %cst_119 : f32 to vector<8x256xf32>
    %160 = arith.cmpf ogt, %158, %159 : vector<8x256xf32>
    %cst_120 = arith.constant 2.000000e-01 : f32
    %161 = vector.broadcast %cst_120 : f32 to vector<8x256xf32>
    %162 = arith.mulf %161, %158 : vector<8x256xf32>
    %163 = arith.select %160, %158, %162 : vector<8x256xi1>, vector<8x256xf32>
    %164 = arith.truncf %163 : vector<8x256xf32> to vector<8x256xbf16>
    %c0_121 = arith.constant 0 : index
    %c0_122 = arith.constant 0 : index
    %c0_123 = arith.constant 0 : index
    %165 = vector.load %arg6[%c0_121, %c0_122, %c0_123] : memref<1x8x256xbf16, #tpu.memory_space<vmem>>, vector<1x8x256xbf16>
    %166 = vector.shape_cast %165 : vector<1x8x256xbf16> to vector<8x256xbf16>
    %167 = vector.shape_cast %164 : vector<8x256xbf16> to vector<1x8x256xbf16>
    tpu.vector_store %arg6[%c0_121, %c0_122, %c0_123], %167 {strides = array<i32>} : memref<1x8x256xbf16, #tpu.memory_space<vmem>>, vector<1x8x256xbf16>,
    return
  }
  func.func @transform_0(%arg0: i32) -> (i32, i32, i32) {
    %c0_i32 = arith.constant 0 : i32
    %c0_i32_0 = arith.constant 0 : i32
    %c0_i32_1 = arith.constant 0 : i32
    return %arg0, %c0_i32, %c0_i32_0 : i32, i32, i32
  }
  func.func @transform_1(%arg0: i32) -> (i32, i32, i32) {
    %c0_i32 = arith.constant 0 : i32
    %c0_i32_0 = arith.constant 0 : i32
    %c0_i32_1 = arith.constant 0 : i32
    %c0_i32_2 = arith.constant 0 : i32
    return %c0_i32, %c0_i32_0, %c0_i32_1 : i32, i32, i32
  }
  func.func @transform_2(%arg0: i32) -> (i32, i32, i32) {
    %c0_i32 = arith.constant 0 : i32
    %c0_i32_0 = arith.constant 0 : i32
    %c0_i32_1 = arith.constant 0 : i32
    %c0_i32_2 = arith.constant 0 : i32
    return %c0_i32, %c0_i32_0, %c0_i32_1 : i32, i32, i32
  }
  func.func @transform_3(%arg0: i32) -> (i32, i32) {
    %c0_i32 = arith.constant 0 : i32
    %c0_i32_0 = arith.constant 0 : i32
    %c0_i32_1 = arith.constant 0 : i32
    return %c0_i32, %c0_i32_0 : i32, i32
  }
  func.func @transform_4(%arg0: i32) -> (i32, i32) {
    %c0_i32 = arith.constant 0 : i32
    %c0_i32_0 = arith.constant 0 : i32
    %c0_i32_1 = arith.constant 0 : i32
    return %c0_i32, %c0_i32_0 : i32, i32
  }
  func.func @transform_5(%arg0: i32) -> (i32, i32, i32) {
    %c0_i32 = arith.constant 0 : i32
    %c0_i32_0 = arith.constant 0 : i32
    %c0_i32_1 = arith.constant 0 : i32
    return %arg0, %c0_i32, %c0_i32_0 : i32, i32, i32
  }
}

</mosaic_0001>

<llo_original>
// kernel: tpu_custom_call.1
$region0: #{tpu_custom_call.1}
  #allocation0 [shape = 'u32[]', space=smem, size = 0x4, offset = 0x4, fixed_abs, tag = 'smem constant byte address 0x4 - core index']
  #allocation1 [shape = 'u32[144,128]{1,0:T(1,128)}', space=vmem, size = 0x12000, scoped, tag = 'internal scratch']
  #allocation2 [shape = 'bf16[4,290]{1,0:T(4,128)(2,1)}', space=vmem, size = 0xc00, scoped, tag = 'scratch operand']
  #allocation3 [shape = 'bf16[8,290]{1,0:T(8,128)(2,1)}', space=vmem, size = 0x1800, scoped, tag = 'scratch operand']
  %s0 = inlined_call_operand.vmem [shape: bf16[2,4,256], index: 0, kind: input, shape index: {}]
  %s1 = inlined_call_operand.vmem [shape: bf16[9,8,4], index: 1, kind: input, shape index: {}]
  %s2 = inlined_call_operand.vmem [shape: bf16[9,8,8], index: 2, kind: input, shape index: {}]
  %s3 = inlined_call_operand.vmem [shape: bf16[8,4], index: 3, kind: input, shape index: {}]
  %s4 = inlined_call_operand.vmem [shape: bf16[8,256], index: 4, kind: input, shape index: {}]
  %s5 = inlined_call_operand.hbm [shape: bf16[2,8,256], index: 5, kind: output, shape index: {}]
  %s6 = sld [smem:[#allocation0]]
  $region53: #{tpu_custom_call.1} parent=0
    _
  %s8 = ssub.s32 1, %s6
  %s9 = scalar_select 0, %s8, %s6
  $region1: #{tpu_custom_call.1} parent=0
    #allocation4 [shape = 'u8[8192]{0}', space=vmem, size = 0x2000, scoped, tag = 'output window, operand 0']
    #allocation5 [shape = 's32[2]{0}', space=sflag, size = 0x8, scoped, tag = 'scoped memory for tpu_custom_call.1']
    %10 = vsyncpa [#allocation5], 0
    %s11 = scalar_lea.sflag [#allocation5], 1
    %12 = vsyncpa %s11, 0
    loop: start=0, step=1, limit=4
    $region2: #{tpu_custom_call.1} parent=1 // loop_pre_header
      _
    $region3: #{tpu_custom_call.1} parent=1 // loop_header
      %s14 = sphi 0, %s18
      %p15 = scmp.ge.s32.totalorder %s14, 4
      %s24 = sphi 0, %s26
      %s27 = sphi 0, %s24
      %s28 = sphi 0, %s27
      %s44 = sphi 0, %s28
      %s48 = sphi 0, %s48
      %s50 = sphi 0, %s48
      %s51 = sphi 0, %s50
      %s65 = sphi 0, %s51
      %s69 = sphi 0, %s69
      %s71 = sphi 0, %s69
      %s72 = sphi 0, %s71
      %s86 = sphi 0, %s72
      %s90 = sphi 0, %s90
      %s92 = sphi 0, %s90
      %s93 = sphi 0, %s92
      %s107 = sphi 0, %s93
      %s111 = sphi 0, %s111
      %s113 = sphi 0, %s111
      %s114 = sphi 0, %s113
      %s128 = sphi 0, %s114
      %s134 = sphi 0, %s136
      %s137 = sphi 0, %s134
      %s138 = sphi 0, %s137
      %s154 = sphi 0, %s138
    $region4: #{tpu_custom_call.1} parent=1 // loop_header_branch
      %17 = sbr.rel (%p15) target = $region8
    $region5: #{tpu_custom_call.1} parent=1 // loop_body
      %s19 = ssub.s32 %s14, 1
      %s20 = ssub.s32 %s14, 2
      %s21 = sadd.s32 %s14, 1
      %s22 = ssub.s32 %s14, %s21
      %p23 = scmp.eq.s32.totalorder %s22, 0
      %s25 = sadd.s32 %s24, 1
      %s26 = scalar_select %p23, %s24, %s25
      %p29 = pneg %p23
      %p30 = scmp.eq.s32.totalorder %s14, 1
      %p31 = por %p29, %p30
      %p32 = scmp.ne.s32.totalorder %s24, %s27
      %p33 = scmp.eq.s32.totalorder %s14, 0
      %p34 = por %p32, %p33
      %p35 = scmp.ne.s32.totalorder %s24, %s27
      %p36 = scmp.eq.s32.totalorder %s19, 1
      %p37 = por %p35, %p36
      %p38 = scmp.ne.s32.totalorder %s27, %s28
      %p39 = scmp.eq.s32.totalorder %s19, 0
      %p40 = por %p38, %p39
      %p41 = scmp.ne.s32.totalorder %s27, %s28
      %p42 = scmp.eq.s32.totalorder %s20, 1
      %p43 = por %p41, %p42
      %p45 = scmp.ne.s32.totalorder %s28, %s44
      %p46 = scmp.eq.s32.totalorder %s20, 0
      %p47 = por %p45, %p46
      %s49 = sadd.s32 %s48, 1
      %p52 = scmp.eq.s32.totalorder %s14, 1
      %p53 = scmp.ne.s32.totalorder %s48, %s50
      %p54 = scmp.eq.s32.totalorder %s14, 0
      %p55 = por %p53, %p54
      %p56 = scmp.ne.s32.totalorder %s48, %s50
      %p57 = scmp.eq.s32.totalorder %s19, 1
      %p58 = por %p56, %p57
      %p59 = scmp.ne.s32.totalorder %s50, %s51
      %p60 = scmp.eq.s32.totalorder %s19, 0
      %p61 = por %p59, %p60
      %p62 = scmp.ne.s32.totalorder %s50, %s51
      %p63 = scmp.eq.s32.totalorder %s20, 1
      %p64 = por %p62, %p63
      %p66 = scmp.ne.s32.totalorder %s51, %s65
      %p67 = scmp.eq.s32.totalorder %s20, 0
      %p68 = por %p66, %p67
      %s70 = sadd.s32 %s69, 1
      %p73 = scmp.eq.s32.totalorder %s14, 1
      %p74 = scmp.ne.s32.totalorder %s69, %s71
      %p75 = scmp.eq.s32.totalorder %s14, 0
      %p76 = por %p74, %p75
      %p77 = scmp.ne.s32.totalorder %s69, %s71
      %p78 = scmp.eq.s32.totalorder %s19, 1
      %p79 = por %p77, %p78
      %p80 = scmp.ne.s32.totalorder %s71, %s72
      %p81 = scmp.eq.s32.totalorder %s19, 0
      %p82 = por %p80, %p81
      %p83 = scmp.ne.s32.totalorder %s71, %s72
      %p84 = scmp.eq.s32.totalorder %s20, 1
      %p85 = por %p83, %p84
      %p87 = scmp.ne.s32.totalorder %s72, %s86
      %p88 = scmp.eq.s32.totalorder %s20, 0
      %p89 = por %p87, %p88
      %s91 = sadd.s32 %s90, 1
      %p94 = scmp.eq.s32.totalorder %s14, 1
      %p95 = scmp.ne.s32.totalorder %s90, %s92
      %p96 = scmp.eq.s32.totalorder %s14, 0
      %p97 = por %p95, %p96
      %p98 = scmp.ne.s32.totalorder %s90, %s92
      %p99 = scmp.eq.s32.totalorder %s19, 1
      %p100 = por %p98, %p99
      %p101 = scmp.ne.s32.totalorder %s92, %s93
      %p102 = scmp.eq.s32.totalorder %s19, 0
      %p103 = por %p101, %p102
      %p104 = scmp.ne.s32.totalorder %s92, %s93
      %p105 = scmp.eq.s32.totalorder %s20, 1
      %p106 = por %p104, %p105
      %p108 = scmp.ne.s32.totalorder %s93, %s107
      %p109 = scmp.eq.s32.totalorder %s20, 0
      %p110 = por %p108, %p109
      %s112 = sadd.s32 %s111, 1
      %p115 = scmp.eq.s32.totalorder %s14, 1
      %p116 = scmp.ne.s32.totalorder %s111, %s113
      %p117 = scmp.eq.s32.totalorder %s14, 0
      %p118 = por %p116, %p117
      %p119 = scmp.ne.s32.totalorder %s111, %s113
      %p120 = scmp.eq.s32.totalorder %s19, 1
      %p121 = por %p119, %p120
      %p122 = scmp.ne.s32.totalorder %s113, %s114
      %p123 = scmp.eq.s32.totalorder %s19, 0
      %p124 = por %p122, %p123
      %p125 = scmp.ne.s32.totalorder %s113, %s114
      %p126 = scmp.eq.s32.totalorder %s20, 1
      %p127 = por %p125, %p126
      %p129 = scmp.ne.s32.totalorder %s114, %s128
      %p130 = scmp.eq.s32.totalorder %s20, 0
      %p131 = por %p129, %p130
      %s132 = ssub.s32 %s14, %s21
      %p133 = scmp.eq.s32.totalorder %s132, 0
      %s135 = sadd.s32 %s134, 1
      %s136 = scalar_select %p133, %s134, %s135
      %p139 = pneg %p133
      %p140 = scmp.eq.s32.totalorder %s14, 1
      %p141 = por %p139, %p140
      %p142 = scmp.ne.s32.totalorder %s134, %s137
      %p143 = scmp.eq.s32.totalorder %s14, 0
      %p144 = por %p142, %p143
      %p145 = scmp.ne.s32.totalorder %s134, %s137
      %p146 = scmp.eq.s32.totalorder %s19, 1
      %p147 = por %p145, %p146
      %p148 = scmp.ne.s32.totalorder %s137, %s138
      %p149 = scmp.eq.s32.totalorder %s19, 0
      %p150 = por %p148, %p149
      %p151 = scmp.ne.s32.totalorder %s137, %s138
      %p152 = scmp.eq.s32.totalorder %s20, 1
      %p153 = por %p151, %p152
      %p155 = scmp.ne.s32.totalorder %s138, %s154
      %p156 = scmp.eq.s32.totalorder %s20, 0
      %p157 = por %p155, %p156
      %p158 = scmp.le.s32.totalorder 1, %s14
      %p159 = scmp.lt.s32.totalorder %s14, 3
      %p160 = pnand %p158, %p159
      %p161 = pneg %p160
      // Predicated region
      $region9: #{tpu_custom_call.1} parent=5 // pred_check
        _
      $region10: #{tpu_custom_call.1} parent=5 // pred_check_branch
        %163 = sbr.rel (%p160) target = $region12
      $region11: #{tpu_custom_call.1} parent=5 // pred_region
        %s164 = ssub.s32 %s14, 1
        // Predicated region
        $region13: #{tpu_custom_call.1} parent=11 // pred_check
          %p165 = pneg %p61
        $region14: #{tpu_custom_call.1} parent=11 // pred_check_branch
          %167 = sbr.rel (%p165) target = $region16
        $region15: #{tpu_custom_call.1} parent=11 // pred_region
          _
        $region16: #{tpu_custom_call.1} parent=11 // pred_fallthru
          _
        // Predicated region
        $region17: #{tpu_custom_call.1} parent=11 // pred_check
          %p168 = pneg %p82
        $region18: #{tpu_custom_call.1} parent=11 // pred_check_branch
          %170 = sbr.rel (%p168) target = $region20
        $region19: #{tpu_custom_call.1} parent=11 // pred_region
          _
        $region20: #{tpu_custom_call.1} parent=11 // pred_fallthru
          _
        // Predicated region
        $region21: #{tpu_custom_call.1} parent=11 // pred_check
          %p171 = pneg %p103
        $region22: #{tpu_custom_call.1} parent=11 // pred_check_branch
          %173 = sbr.rel (%p171) target = $region24
        $region23: #{tpu_custom_call.1} parent=11 // pred_region
          _
        $region24: #{tpu_custom_call.1} parent=11 // pred_fallthru
          _
        // Predicated region
        $region25: #{tpu_custom_call.1} parent=11 // pred_check
          %p174 = pneg %p124
        $region26: #{tpu_custom_call.1} parent=11 // pred_check_branch
          %176 = sbr.rel (%p174) target = $region28
        $region27: #{tpu_custom_call.1} parent=11 // pred_region
          _
        $region28: #{tpu_custom_call.1} parent=11 // pred_fallthru
          _
      $region12: #{tpu_custom_call.1} parent=5 // pred_fallthru
        _
      %p177 = scmp.lt.s32.totalorder %s14, 2
      // Predicated region
      $region29: #{tpu_custom_call.1} parent=5 // pred_check
        %p178 = pneg %p177
      $region30: #{tpu_custom_call.1} parent=5 // pred_check_branch
        %180 = sbr.rel (%p178) target = $region32
      $region31: #{tpu_custom_call.1} parent=5 // pred_region
        // Predicated region
        $region33: #{tpu_custom_call.1} parent=31 // pred_check
          %p181 = pneg %p34
        $region34: #{tpu_custom_call.1} parent=31 // pred_check_branch
          %183 = sbr.rel (%p181) target = $region36
        $region35: #{tpu_custom_call.1} parent=31 // pred_region
          %p184 = scmp.lt.s32.totalorder %s14, 1
          %s185 = scalar_select %p184, %s14, 1
          %s186 = smul.addr %s185, 2
          %s187 = smul.addr %s186, 2
          %s188 = scalar_lea.vmem %s0, %s187
        $region36: #{tpu_custom_call.1} parent=31 // pred_fallthru
          _
      $region32: #{tpu_custom_call.1} parent=5 // pred_fallthru
        _
      %p189 = scmp.le.s32.totalorder 1, %s14
      %p190 = scmp.lt.s32.totalorder %s14, 3
      %p191 = pnand %p189, %p190
      %p192 = pneg %p191
      // Predicated region
      $region37: #{tpu_custom_call.1} parent=5 // pred_check
        _
      $region38: #{tpu_custom_call.1} parent=5 // pred_check_branch
        %194 = sbr.rel (%p191) target = $region40
      $region39: #{tpu_custom_call.1} parent=5 // pred_region
        %s195 = ssub.s32 %s14, 1
        %p196 = scmp.lt.s32.totalorder %s19, 1
        %s197 = scalar_select %p196, %s19, 1
        %s198 = smul.addr %s197, 2
        %s199 = smul.addr %s198, 2
        %s200 = scalar_lea.vmem %s0, %s199
        %p201 = pneg %p40
        %p202 = pneg %p37
        %p203 = pneg %p61
        %p204 = pneg %p58
        %p205 = pneg %p82
        %p206 = pneg %p79
        %p207 = pneg %p103
        %p208 = pneg %p100
        %p209 = pneg %p124
        %p210 = pneg %p121
        %p211 = pneg %p150
        %p212 = pneg %p147
        %s213 = sand.u32 %s137, 1
        %s214 = scalar_lea.sflag [#allocation5], %s213
        %s215 = sand.u32 %s137, 1
        %s216 = smul.addr %s215, 8
        %s217 = scalar_lea.vmem [#allocation4], %s216
        %p218 = scmp.lt.s32.totalorder %s19, 1
        %s219 = scalar_select %p218, %s19, 1
        %s220 = smul.addr %s219, 2
        %s221 = smul.addr %s220, 2
        %s222 = scalar_lea.vmem %s0, %s221
        %vm224 = vcmask 132096
        %225 = vst.msk [vmem:[#allocation2] sm:$0x3] %vm224, 0
        %vm226 = vcmask 271496
        %227 = vst.msk [vmem:[#allocation2 + $0x4] sm:$0x3] %vm226, 0
        %vm228 = vcmask 134144
        %229 = vst.msk [vmem:[#allocation3] sm:$0xf] %vm228, 0
        %vm230 = vcmask 273544
        %231 = vst.msk [vmem:[#allocation3 + $0x8] sm:$0xf] %vm230, 0
        %v232 = vld [vmem:[%s222] sm:$0xf]
        %234 = vrot.lane.b32.xlu0 %v232, 17
        %v235 = vpop.permute.xlu0 %234
        %v236 = vrot.slane %v235, 6
        %vm237 = vcmask 138240
        %v238 = vsel %vm237, %v236, %v235
        %vm240 = vcmask 1041544
        %vm241 = vcmask 1043458
        %vm242 = vmor %vm241, %vm240
        %vm243 = vcmask 136196
        %vm244 = vmor %vm243, %vm242
        %245 = vst.msk [vmem:[#allocation2] sm:$0x3f] %vm244, %v238
        %v246 = vld [vmem:[%s4] sm:$0xff]
        %v247 = vld [vmem:[#allocation2] sm:$0xf]
        %v249 = vunpack.c.l.b16 %v246
        %v250 = vunpack.c.h.b16 %v246
        %v251 = vpack.c.b16 %v249, %v249
        %v252 = vpack.c.b16 %v250, %v250
        %v254 = vpack.i.b16 %v251, %v251
        %v256 = vlaneseq
        %v257 = vshrl.u32 %v256, 7
        %v258 = vsub.s32 0, %v257
        %v259 = vrot.slane %v254, %v258
        %v261 = vpack.i.b16 %v252, %v252
        %v263 = vlaneseq
        %v264 = vshrl.u32 %v263, 7
        %v265 = vsub.s32 0, %v264
        %v266 = vrot.slane %v261, %v265
        %v269 = vcombine.low %v259, %v266
        %v271 = vunpack.c.l.s4 1983009808
        %v272 = vunpack.c.0.s8 %v271
        %v273 = vlaneseq
        %v274 = vshrl.u32 %v273, 7
        %v275 = vsub.s32 %v272, %v274
        %v276 = vrot.slane %v269, %v275
        %v278 = vmul.bf16 %v247, %v276
        %v279 = vld [vmem:[%s1] sm:$0xf]
        %v280 = vld [vmem:[#allocation2] sm:$0x3f]
        %v281 = vshrl.u32 %v251, 16
        %v282 = vpack.i.b16 %v281, %v281
        %v284 = vlaneseq
        %v285 = vshrl.u32 %v284, 7
        %v286 = vsub.s32 0, %v285
        %v287 = vrot.slane %v282, %v286
        %v288 = vshrl.u32 %v252, 16
        %v289 = vpack.i.b16 %v288, %v288
        %v291 = vlaneseq
        %v292 = vshrl.u32 %v291, 7
        %v293 = vsub.s32 0, %v292
        %v294 = vrot.slane %v289, %v293
        %v297 = vcombine.low %v287, %v294
        %v299 = vunpack.c.l.s4 1983009808
        %v300 = vunpack.c.0.s8 %v299
        %v301 = vlaneseq
        %v302 = vshrl.u32 %v301, 7
        %v303 = vsub.s32 %v300, %v302
        %v304 = vrot.slane %v297, %v303
        %305 = vrot.lane.b32.xlu0 %v304, 1
        %v306 = vpop.permute.xlu0 %305
        %v307 = vrot.slane %v306, 6
        %vm308 = vcmask 7168
        %v309 = vsel %vm308, %v307, %v306
        %v311 = vmul.bf16 %v280, %v309
        %s312 = scalar_lea.vmem %s1, 4
        %v313 = vld [vmem:[%s312] sm:$0xf]
        %v315 = vcombine.high %v311, %v311
        %v317 = vunpack.c.l.s4 1983009808
        %v318 = vunpack.c.0.s8 %v317
        %v319 = vlaneseq
        %v320 = vshrl.u32 %v319, 7
        %v321 = vsub.s32 %v318, %v320
        %v322 = vrot.slane %v311, %v321
        %v324 = vunpack.c.l.s4 1983009808
        %v325 = vunpack.c.0.s8 %v324
        %v326 = vlaneseq
        %v327 = vshrl.u32 %v326, 7
        %v328 = vsub.s32 %v325, %v327
        %v329 = vrot.slane %v315, %v328
        %v330 = vcombine.high %v322, %v322
        %331 = vrot.lane.b32.xlu0 %v322, 127
        %v332 = vpop.permute.xlu0 %331
        %333 = vrot.lane.b32.xlu0 %v330, 127
        %v334 = vpop.permute.xlu0 %333
        %335 = vrot.lane.b32.xlu0 %v329, 127
        %v336 = vpop.permute.xlu0 %335
        %vm337 = vcmask 1039360
        %v338 = vsel %vm337, %v332, %v334
        %v339 = vsel %vm337, %v334, %v336
        %vm340 = vcmask 31744
        %v342 = vsel %vm340, %v313, 0
        %vm344 = vcmask 1041408
        %v346 = vsel %vm344, %v338, 0
        %v349 = vsel %vm344, %v339, 0
        %351 = vmatprep.subr.bf16.mxu0 %v349
        %352 = vmatpush1.bf16.msra.mxu0 %v346
        %353 = vmatprep.subr.bf16.mxu0 0
        %354 = vmatpush1.bf16.msra.mxu0 0
        %355 = vmatprep.subr.bf16.mxu0 0
        %356 = vmatpush1.bf16.msra.mxu0 0
        %357 = vmatprep.subr.bf16.mxu0 0
        %358 = vmatpush1.bf16.msra.mxu0 0
        %359 = vmatprep.subr.bf16.mxu0 0
        %360 = vmatpush1.bf16.msra.mxu0 0
        %361 = vmatprep.subr.bf16.mxu0 0
        %362 = vmatpush1.bf16.msra.mxu0 0
        %363 = vmatprep.subr.bf16.mxu0 0
        %364 = vmatpush1.bf16.msra.mxu0 0
        %365 = vmatprep.subr.bf16.mxu0 0
        %366 = vmatpush1.bf16.msra.mxu0 0
        %367 = vmatprep.subr.bf16.mxu0 0
        %368 = vmatpush1.bf16.msra.mxu0 0
        %369 = vmatprep.subr.bf16.mxu0 0
        %370 = vmatpush1.bf16.msra.mxu0 0
        %371 = vmatprep.subr.bf16.mxu0 0
        %372 = vmatpush1.bf16.msra.mxu0 0
        %373 = vmatprep.subr.bf16.mxu0 0
        %374 = vmatpush1.bf16.msra.mxu0 0
        %375 = vmatprep.subr.bf16.mxu0 0
        %376 = vmatpush1.bf16.msra.mxu0 0
        %377 = vmatprep.subr.bf16.mxu0 0
        %378 = vmatpush1.bf16.msra.mxu0 0
        %379 = vmatprep.subr.bf16.mxu0 0
        %380 = vmatpush1.bf16.msra.mxu0 0
        %381 = vmatprep.subr.bf16.mxu0 0
        %382 = vmatpush1.bf16.msra.mxu0 0
        %383 = vmatprep.mubr.bf16.mxu0 0
        %384 = vmatmul.mubr.bf16.gmra.mrb[0].mxu0 %v342
        %v385 = vpop.f32.mrb[0].mxu0
        %v386 = vadd.f32 0.0, %v385
        %v387 = vpop.f32.mrb[0].mxu0
        %v388 = vadd.f32 0.0, %v387
        %v389 = vpop.f32.mrb[0].mxu0
        %v390 = vpop.f32.mrb[0].mxu0
        %391 = vdwg.mxu0
        %v394 = vunpack.c.l.s4 1983009808
        %v395 = vunpack.c.0.s8 %v394
        %v396 = vlaneseq
        %v397 = vshrl.u32 %v396, 7
        %v398 = vsub.s32 %v395, %v397
        %v399 = vrot.slane %v278, %v398
        %v400 = vcombine.high %v399, %v399
        %v402 = vsel %vm340, %v279, 0
        %v405 = vsel %vm344, %v399, 0
        %v408 = vsel %vm344, %v400, 0
        %410 = vmatprep.subr.bf16.mxu0 %v408
        %411 = vmatpush1.bf16.msra.mxu0 %v405
        %412 = vmatprep.subr.bf16.mxu0 0
        %413 = vmatpush1.bf16.msra.mxu0 0
        %414 = vmatprep.subr.bf16.mxu0 0
        %415 = vmatpush1.bf16.msra.mxu0 0
        %416 = vmatprep.subr.bf16.mxu0 0
        %417 = vmatpush1.bf16.msra.mxu0 0
        %418 = vmatprep.subr.bf16.mxu0 0
        %419 = vmatpush1.bf16.msra.mxu0 0
        %420 = vmatprep.subr.bf16.mxu0 0
        %421 = vmatpush1.bf16.msra.mxu0 0
        %422 = vmatprep.subr.bf16.mxu0 0
        %423 = vmatpush1.bf16.msra.mxu0 0
        %424 = vmatprep.subr.bf16.mxu0 0
        %425 = vmatpush1.bf16.msra.mxu0 0
        %426 = vmatprep.subr.bf16.mxu0 0
        %427 = vmatpush1.bf16.msra.mxu0 0
        %428 = vmatprep.subr.bf16.mxu0 0
        %429 = vmatpush1.bf16.msra.mxu0 0
        %430 = vmatprep.subr.bf16.mxu0 0
        %431 = vmatpush1.bf16.msra.mxu0 0
        %432 = vmatprep.subr.bf16.mxu0 0
        %433 = vmatpush1.bf16.msra.mxu0 0
        %434 = vmatprep.subr.bf16.mxu0 0
        %435 = vmatpush1.bf16.msra.mxu0 0
        %436 = vmatprep.subr.bf16.mxu0 0
        %437 = vmatpush1.bf16.msra.mxu0 0
        %438 = vmatprep.subr.bf16.mxu0 0
        %439 = vmatpush1.bf16.msra.mxu0 0
        %440 = vmatprep.subr.bf16.mxu0 0
        %441 = vmatpush1.bf16.msra.mxu0 0
        %442 = vmatprep.mubr.bf16.mxu0 0
        %443 = vmatmul.mubr.bf16.gmra.mrb[0].mxu0 %v402
        %v444 = vpop.f32.mrb[0].mxu0
        %v445 = vadd.f32 %v386, %v444
        %v446 = vpop.f32.mrb[0].mxu0
        %v447 = vadd.f32 %v388, %v446
        %v448 = vpop.f32.mrb[0].mxu0
        %v449 = vpop.f32.mrb[0].mxu0
        %450 = vdwg.mxu0
        %v451 = vld [vmem:[#allocation2] sm:$0x3f]
        %v452 = vlaneseq
        %v453 = vshrl.u32 %v452, 7
        %v454 = vsub.s32 1, %v453
        %v455 = vrot.slane %v254, %v454
        %v456 = vlaneseq
        %v457 = vshrl.u32 %v456, 7
        %v458 = vsub.s32 1, %v457
        %v459 = vrot.slane %v261, %v458
        %v462 = vcombine.low %v455, %v459
        %v464 = vunpack.c.l.s4 1983009808
        %v465 = vunpack.c.0.s8 %v464
        %v466 = vlaneseq
        %v467 = vshrl.u32 %v466, 7
        %v468 = vsub.s32 %v465, %v467
        %v469 = vrot.slane %v462, %v468
        %470 = vrot.lane.b32.xlu0 %v469, 2
        %v471 = vpop.permute.xlu0 %470
        %v472 = vrot.slane %v471, 6
        %vm473 = vcmask 15360
        %v474 = vsel %vm473, %v472, %v471
        %v476 = vmul.bf16 %v451, %v474
        %s477 = scalar_lea.vmem %s1, 8
        %v478 = vld [vmem:[%s477] sm:$0xf]
        %v480 = vcombine.high %v476, %v476
        %v482 = vunpack.c.l.s4 1983009808
        %v483 = vunpack.c.0.s8 %v482
        %v484 = vlaneseq
        %v485 = vshrl.u32 %v484, 7
        %v486 = vsub.s32 %v483, %v485
        %v487 = vrot.slane %v476, %v486
        %v489 = vunpack.c.l.s4 1983009808
        %v490 = vunpack.c.0.s8 %v489
        %v491 = vlaneseq
        %v492 = vshrl.u32 %v491, 7
        %v493 = vsub.s32 %v490, %v492
        %v494 = vrot.slane %v480, %v493
        %v495 = vcombine.high %v487, %v487
        %496 = vrot.lane.b32.xlu0 %v487, 126
        %v497 = vpop.permute.xlu0 %496
        %498 = vrot.lane.b32.xlu0 %v495, 126
        %v499 = vpop.permute.xlu0 %498
        %500 = vrot.lane.b32.xlu0 %v494, 126
        %v501 = vpop.permute.xlu0 %500
        %vm502 = vcmask 1031168
        %v503 = vsel %vm502, %v497, %v499
        %v504 = vsel %vm502, %v499, %v501
        %v506 = vsel %vm340, %v478, 0
        %v509 = vsel %vm344, %v503, 0
        %v512 = vsel %vm344, %v504, 0
        %514 = vmatprep.subr.bf16.mxu0 %v512
        %515 = vmatpush1.bf16.msra.mxu0 %v509
        %516 = vmatprep.subr.bf16.mxu0 0
        %517 = vmatpush1.bf16.msra.mxu0 0
        %518 = vmatprep.subr.bf16.mxu0 0
        %519 = vmatpush1.bf16.msra.mxu0 0
        %520 = vmatprep.subr.bf16.mxu0 0
        %521 = vmatpush1.bf16.msra.mxu0 0
        %522 = vmatprep.subr.bf16.mxu0 0
        %523 = vmatpush1.bf16.msra.mxu0 0
        %524 = vmatprep.subr.bf16.mxu0 0
        %525 = vmatpush1.bf16.msra.mxu0 0
        %526 = vmatprep.subr.bf16.mxu0 0
        %527 = vmatpush1.bf16.msra.mxu0 0
        %528 = vmatprep.subr.bf16.mxu0 0
        %529 = vmatpush1.bf16.msra.mxu0 0
        %530 = vmatprep.subr.bf16.mxu0 0
        %531 = vmatpush1.bf16.msra.mxu0 0
        %532 = vmatprep.subr.bf16.mxu0 0
        %533 = vmatpush1.bf16.msra.mxu0 0
        %534 = vmatprep.subr.bf16.mxu0 0
        %535 = vmatpush1.bf16.msra.mxu0 0
        %536 = vmatprep.subr.bf16.mxu0 0
        %537 = vmatpush1.bf16.msra.mxu0 0
        %538 = vmatprep.subr.bf16.mxu0 0
        %539 = vmatpush1.bf16.msra.mxu0 0
        %540 = vmatprep.subr.bf16.mxu0 0
        %541 = vmatpush1.bf16.msra.mxu0 0
        %542 = vmatprep.subr.bf16.mxu0 0
        %543 = vmatpush1.bf16.msra.mxu0 0
        %544 = vmatprep.subr.bf16.mxu0 0
        %545 = vmatpush1.bf16.msra.mxu0 0
        %546 = vmatprep.mubr.bf16.mxu0 0
        %547 = vmatmul.mubr.bf16.gmra.mrb[0].mxu0 %v506
        %v548 = vpop.f32.mrb[0].mxu0
        %v549 = vadd.f32 0.0, %v548
        %v550 = vpop.f32.mrb[0].mxu0
        %v551 = vadd.f32 0.0, %v550
        %v552 = vpop.f32.mrb[0].mxu0
        %v553 = vpop.f32.mrb[0].mxu0
        %554 = vdwg.mxu0
        %v555 = vadd.f32 %v445, %v549
        %v556 = vadd.f32 %v447, %v551
        %v557 = vld [vmem:[#allocation2] sm:$0x3f]
        %v558 = vlaneseq
        %v559 = vshrl.u32 %v558, 7
        %v560 = vsub.s32 1, %v559
        %v561 = vrot.slane %v282, %v560
        %v562 = vlaneseq
        %v563 = vshrl.u32 %v562, 7
        %v564 = vsub.s32 1, %v563
        %v565 = vrot.slane %v289, %v564
        %v568 = vcombine.low %v561, %v565
        %v570 = vunpack.c.l.s4 1983009808
        %v571 = vunpack.c.0.s8 %v570
        %v572 = vlaneseq
        %v573 = vshrl.u32 %v572, 7
        %v574 = vsub.s32 %v571, %v573
        %v575 = vrot.slane %v568, %v574
        %576 = vrot.lane.b32.xlu0 %v575, 16
        %v577 = vpop.permute.xlu0 %576
        %v578 = vrot.slane %v577, 6
        %vm579 = vcmask 130048
        %v580 = vsel %vm579, %v578, %v577
        %v582 = vmul.bf16 %v557, %v580
        %s583 = scalar_lea.vmem %s1, 12
        %v584 = vld [vmem:[%s583] sm:$0xf]
        %v586 = vcombine.high %v582, %v582
        %v588 = vunpack.c.l.s4 1983009808
        %v589 = vunpack.c.0.s8 %v588
        %v590 = vlaneseq
        %v591 = vshrl.u32 %v590, 7
        %v592 = vsub.s32 %v589, %v591
        %v593 = vrot.slane %v582, %v592
        %v595 = vunpack.c.l.s4 1983009808
        %v596 = vunpack.c.0.s8 %v595
        %v597 = vlaneseq
        %v598 = vshrl.u32 %v597, 7
        %v599 = vsub.s32 %v596, %v598
        %v600 = vrot.slane %v586, %v599
        %v601 = vcombine.high %v593, %v593
        %602 = vrot.lane.b32.xlu0 %v593, 112
        %v603 = vpop.permute.xlu0 %602
        %604 = vrot.lane.b32.xlu0 %v601, 112
        %v605 = vpop.permute.xlu0 %604
        %606 = vrot.lane.b32.xlu0 %v600, 112
        %v607 = vpop.permute.xlu0 %606
        %vm608 = vcmask 916480
        %v609 = vsel %vm608, %v603, %v605
        %v610 = vsel %vm608, %v605, %v607
        %v612 = vsel %vm340, %v584, 0
        %v615 = vsel %vm344, %v609, 0
        %v618 = vsel %vm344, %v610, 0
        %620 = vmatprep.subr.bf16.mxu0 %v618
        %621 = vmatpush1.bf16.msra.mxu0 %v615
        %622 = vmatprep.subr.bf16.mxu0 0
        %623 = vmatpush1.bf16.msra.mxu0 0
        %624 = vmatprep.subr.bf16.mxu0 0
        %625 = vmatpush1.bf16.msra.mxu0 0
        %626 = vmatprep.subr.bf16.mxu0 0
        %627 = vmatpush1.bf16.msra.mxu0 0
        %628 = vmatprep.subr.bf16.mxu0 0
        %629 = vmatpush1.bf16.msra.mxu0 0
        %630 = vmatprep.subr.bf16.mxu0 0
        %631 = vmatpush1.bf16.msra.mxu0 0
        %632 = vmatprep.subr.bf16.mxu0 0
        %633 = vmatpush1.bf16.msra.mxu0 0
        %634 = vmatprep.subr.bf16.mxu0 0
        %635 = vmatpush1.bf16.msra.mxu0 0
        %636 = vmatprep.subr.bf16.mxu0 0
        %637 = vmatpush1.bf16.msra.mxu0 0
        %638 = vmatprep.subr.bf16.mxu0 0
        %639 = vmatpush1.bf16.msra.mxu0 0
        %640 = vmatprep.subr.bf16.mxu0 0
        %641 = vmatpush1.bf16.msra.mxu0 0
        %642 = vmatprep.subr.bf16.mxu0 0
        %643 = vmatpush1.bf16.msra.mxu0 0
        %644 = vmatprep.subr.bf16.mxu0 0
        %645 = vmatpush1.bf16.msra.mxu0 0
        %646 = vmatprep.subr.bf16.mxu0 0
        %647 = vmatpush1.bf16.msra.mxu0 0
        %648 = vmatprep.subr.bf16.mxu0 0
        %649 = vmatpush1.bf16.msra.mxu0 0
        %650 = vmatprep.subr.bf16.mxu0 0
        %651 = vmatpush1.bf16.msra.mxu0 0
        %652 = vmatprep.mubr.bf16.mxu0 0
        %653 = vmatmul.mubr.bf16.gmra.mrb[0].mxu0 %v612
        %v654 = vpop.f32.mrb[0].mxu0
        %v655 = vadd.f32 0.0, %v654
        %v656 = vpop.f32.mrb[0].mxu0
        %v657 = vadd.f32 0.0, %v656
        %v658 = vpop.f32.mrb[0].mxu0
        %v659 = vpop.f32.mrb[0].mxu0
        %660 = vdwg.mxu0
        %v661 = vadd.f32 %v555, %v655
        %v662 = vadd.f32 %v556, %v657
        %v663 = vld [vmem:[#allocation2] sm:$0x3f]
        %s664 = scalar_lea.vmem %s1, 16
        %v665 = vld [vmem:[%s664] sm:$0xf]
        %v667 = vcombine.high %v663, %v663
        %v669 = vunpack.c.l.s4 1983009808
        %v670 = vunpack.c.0.s8 %v669
        %v671 = vlaneseq
        %v672 = vshrl.u32 %v671, 7
        %v673 = vsub.s32 %v670, %v672
        %v674 = vrot.slane %v663, %v673
        %v676 = vunpack.c.l.s4 1983009808
        %v677 = vunpack.c.0.s8 %v676
        %v678 = vlaneseq
        %v679 = vshrl.u32 %v678, 7
        %v680 = vsub.s32 %v677, %v679
        %v681 = vrot.slane %v667, %v680
        %v682 = vcombine.high %v674, %v674
        %683 = vrot.lane.b32.xlu0 %v674, 111
        %v684 = vpop.permute.xlu0 %683
        %685 = vrot.lane.b32.xlu0 %v682, 111
        %v686 = vpop.permute.xlu0 %685
        %687 = vrot.lane.b32.xlu0 %v681, 111
        %v688 = vpop.permute.xlu0 %687
        %vm689 = vcmask 908288
        %v690 = vsel %vm689, %v684, %v686
        %v691 = vsel %vm689, %v686, %v688
        %v693 = vsel %vm340, %v665, 0
        %v696 = vsel %vm344, %v690, 0
        %v699 = vsel %vm344, %v691, 0
        %701 = vmatprep.subr.bf16.mxu0 %v699
        %702 = vmatpush1.bf16.msra.mxu0 %v696
        %703 = vmatprep.subr.bf16.mxu0 0
        %704 = vmatpush1.bf16.msra.mxu0 0
        %705 = vmatprep.subr.bf16.mxu0 0
        %706 = vmatpush1.bf16.msra.mxu0 0
        %707 = vmatprep.subr.bf16.mxu0 0
        %708 = vmatpush1.bf16.msra.mxu0 0
        %709 = vmatprep.subr.bf16.mxu0 0
        %710 = vmatpush1.bf16.msra.mxu0 0
        %711 = vmatprep.subr.bf16.mxu0 0
        %712 = vmatpush1.bf16.msra.mxu0 0
        %713 = vmatprep.subr.bf16.mxu0 0
        %714 = vmatpush1.bf16.msra.mxu0 0
        %715 = vmatprep.subr.bf16.mxu0 0
        %716 = vmatpush1.bf16.msra.mxu0 0
        %717 = vmatprep.subr.bf16.mxu0 0
        %718 = vmatpush1.bf16.msra.mxu0 0
        %719 = vmatprep.subr.bf16.mxu0 0
        %720 = vmatpush1.bf16.msra.mxu0 0
        %721 = vmatprep.subr.bf16.mxu0 0
        %722 = vmatpush1.bf16.msra.mxu0 0
        %723 = vmatprep.subr.bf16.mxu0 0
        %724 = vmatpush1.bf16.msra.mxu0 0
        %725 = vmatprep.subr.bf16.mxu0 0
        %726 = vmatpush1.bf16.msra.mxu0 0
        %727 = vmatprep.subr.bf16.mxu0 0
        %728 = vmatpush1.bf16.msra.mxu0 0
        %729 = vmatprep.subr.bf16.mxu0 0
        %730 = vmatpush1.bf16.msra.mxu0 0
        %731 = vmatprep.subr.bf16.mxu0 0
        %732 = vmatpush1.bf16.msra.mxu0 0
        %733 = vmatprep.mubr.bf16.mxu0 0
        %734 = vmatmul.mubr.bf16.gmra.mrb[0].mxu0 %v693
        %v735 = vpop.f32.mrb[0].mxu0
        %v736 = vadd.f32 0.0, %v735
        %v737 = vpop.f32.mrb[0].mxu0
        %v738 = vadd.f32 0.0, %v737
        %v739 = vpop.f32.mrb[0].mxu0
        %v740 = vpop.f32.mrb[0].mxu0
        %741 = vdwg.mxu0
        %v742 = vadd.f32 %v661, %v736
        %v743 = vadd.f32 %v662, %v738
        %v744 = vld [vmem:[#allocation2] sm:$0x3f]
        %v745 = vlaneseq
        %v746 = vshrl.u32 %v745, 7
        %v747 = vsub.s32 2, %v746
        %v748 = vrot.slane %v254, %v747
        %v749 = vlaneseq
        %v750 = vshrl.u32 %v749, 7
        %v751 = vsub.s32 2, %v750
        %v752 = vrot.slane %v261, %v751
        %v755 = vcombine.low %v748, %v752
        %v757 = vunpack.c.l.s4 1983009808
        %v758 = vunpack.c.0.s8 %v757
        %v759 = vlaneseq
        %v760 = vshrl.u32 %v759, 7
        %v761 = vsub.s32 %v758, %v760
        %v762 = vrot.slane %v755, %v761
        %763 = vrot.lane.b32.xlu0 %v762, 18
        %v764 = vpop.permute.xlu0 %763
        %v765 = vrot.slane %v764, 6
        %vm766 = vcmask 146432
        %v767 = vsel %vm766, %v765, %v764
        %v769 = vmul.bf16 %v744, %v767
        %s770 = scalar_lea.vmem %s1, 20
        %v771 = vld [vmem:[%s770] sm:$0xf]
        %v773 = vcombine.high %v769, %v769
        %v775 = vunpack.c.l.s4 1983009808
        %v776 = vunpack.c.0.s8 %v775
        %v777 = vlaneseq
        %v778 = vshrl.u32 %v777, 7
        %v779 = vsub.s32 %v776, %v778
        %v780 = vrot.slane %v769, %v779
        %v782 = vunpack.c.l.s4 1983009808
        %v783 = vunpack.c.0.s8 %v782
        %v784 = vlaneseq
        %v785 = vshrl.u32 %v784, 7
        %v786 = vsub.s32 %v783, %v785
        %v787 = vrot.slane %v773, %v786
        %v788 = vcombine.high %v780, %v780
        %789 = vrot.lane.b32.xlu0 %v780, 110
        %v790 = vpop.permute.xlu0 %789
        %791 = vrot.lane.b32.xlu0 %v788, 110
        %v792 = vpop.permute.xlu0 %791
        %793 = vrot.lane.b32.xlu0 %v787, 110
        %v794 = vpop.permute.xlu0 %793
        %vm795 = vcmask 900096
        %v796 = vsel %vm795, %v790, %v792
        %v797 = vsel %vm795, %v792, %v794
        %v799 = vsel %vm340, %v771, 0
        %v802 = vsel %vm344, %v796, 0
        %v805 = vsel %vm344, %v797, 0
        %807 = vmatprep.subr.bf16.mxu0 %v805
        %808 = vmatpush1.bf16.msra.mxu0 %v802
        %809 = vmatprep.subr.bf16.mxu0 0
        %810 = vmatpush1.bf16.msra.mxu0 0
        %811 = vmatprep.subr.bf16.mxu0 0
        %812 = vmatpush1.bf16.msra.mxu0 0
        %813 = vmatprep.subr.bf16.mxu0 0
        %814 = vmatpush1.bf16.msra.mxu0 0
        %815 = vmatprep.subr.bf16.mxu0 0
        %816 = vmatpush1.bf16.msra.mxu0 0
        %817 = vmatprep.subr.bf16.mxu0 0
        %818 = vmatpush1.bf16.msra.mxu0 0
        %819 = vmatprep.subr.bf16.mxu0 0
        %820 = vmatpush1.bf16.msra.mxu0 0
        %821 = vmatprep.subr.bf16.mxu0 0
        %822 = vmatpush1.bf16.msra.mxu0 0
        %823 = vmatprep.subr.bf16.mxu0 0
        %824 = vmatpush1.bf16.msra.mxu0 0
        %825 = vmatprep.subr.bf16.mxu0 0
        %826 = vmatpush1.bf16.msra.mxu0 0
        %827 = vmatprep.subr.bf16.mxu0 0
        %828 = vmatpush1.bf16.msra.mxu0 0
        %829 = vmatprep.subr.bf16.mxu0 0
        %830 = vmatpush1.bf16.msra.mxu0 0
        %831 = vmatprep.subr.bf16.mxu0 0
        %832 = vmatpush1.bf16.msra.mxu0 0
        %833 = vmatprep.subr.bf16.mxu0 0
        %834 = vmatpush1.bf16.msra.mxu0 0
        %835 = vmatprep.subr.bf16.mxu0 0
        %836 = vmatpush1.bf16.msra.mxu0 0
        %837 = vmatprep.subr.bf16.mxu0 0
        %838 = vmatpush1.bf16.msra.mxu0 0
        %839 = vmatprep.mubr.bf16.mxu0 0
        %840 = vmatmul.mubr.bf16.gmra.mrb[0].mxu0 %v799
        %v841 = vpop.f32.mrb[0].mxu0
        %v842 = vadd.f32 0.0, %v841
        %v843 = vpop.f32.mrb[0].mxu0
        %v844 = vadd.f32 0.0, %v843
        %v845 = vpop.f32.mrb[0].mxu0
        %v846 = vpop.f32.mrb[0].mxu0
        %847 = vdwg.mxu0
        %v848 = vadd.f32 %v742, %v842
        %v849 = vadd.f32 %v743, %v844
        %v850 = vld [vmem:[#allocation2] sm:$0x3f]
        %v851 = vlaneseq
        %v852 = vshrl.u32 %v851, 7
        %v853 = vsub.s32 2, %v852
        %v854 = vrot.slane %v282, %v853
        %v855 = vlaneseq
        %v856 = vshrl.u32 %v855, 7
        %v857 = vsub.s32 2, %v856
        %v858 = vrot.slane %v289, %v857
        %v861 = vcombine.low %v854, %v858
        %v863 = vunpack.c.l.s4 1983009808
        %v864 = vunpack.c.0.s8 %v863
        %v865 = vlaneseq
        %v866 = vshrl.u32 %v865, 7
        %v867 = vsub.s32 %v864, %v866
        %v868 = vrot.slane %v861, %v867
        %869 = vrot.lane.b32.xlu0 %v868, 32
        %v870 = vpop.permute.xlu0 %869
        %v871 = vrot.slane %v870, 6
        %vm872 = vcmask 261120
        %v873 = vsel %vm872, %v871, %v870
        %v875 = vmul.bf16 %v850, %v873
        %s876 = scalar_lea.vmem %s1, 24
        %v877 = vld [vmem:[%s876] sm:$0xf]
        %v879 = vcombine.high %v875, %v875
        %v881 = vunpack.c.l.s4 1983009808
        %v882 = vunpack.c.0.s8 %v881
        %v883 = vlaneseq
        %v884 = vshrl.u32 %v883, 7
        %v885 = vsub.s32 %v882, %v884
        %v886 = vrot.slane %v875, %v885
        %v888 = vunpack.c.l.s4 1983009808
        %v889 = vunpack.c.0.s8 %v888
        %v890 = vlaneseq
        %v891 = vshrl.u32 %v890, 7
        %v892 = vsub.s32 %v889, %v891
        %v893 = vrot.slane %v879, %v892
        %v894 = vcombine.high %v886, %v886
        %895 = vrot.lane.b32.xlu0 %v886, 96
        %v896 = vpop.permute.xlu0 %895
        %897 = vrot.lane.b32.xlu0 %v894, 96
        %v898 = vpop.permute.xlu0 %897
        %899 = vrot.lane.b32.xlu0 %v893, 96
        %v900 = vpop.permute.xlu0 %899
        %vm901 = vcmask 785408
        %v902 = vsel %vm901, %v896, %v898
        %v903 = vsel %vm901, %v898, %v900
        %v905 = vsel %vm340, %v877, 0
        %v908 = vsel %vm344, %v902, 0
        %v911 = vsel %vm344, %v903, 0
        %913 = vmatprep.subr.bf16.mxu0 %v911
        %914 = vmatpush1.bf16.msra.mxu0 %v908
        %915 = vmatprep.subr.bf16.mxu0 0
        %916 = vmatpush1.bf16.msra.mxu0 0
        %917 = vmatprep.subr.bf16.mxu0 0
        %918 = vmatpush1.bf16.msra.mxu0 0
        %919 = vmatprep.subr.bf16.mxu0 0
        %920 = vmatpush1.bf16.msra.mxu0 0
        %921 = vmatprep.subr.bf16.mxu0 0
        %922 = vmatpush1.bf16.msra.mxu0 0
        %923 = vmatprep.subr.bf16.mxu0 0
        %924 = vmatpush1.bf16.msra.mxu0 0
        %925 = vmatprep.subr.bf16.mxu0 0
        %926 = vmatpush1.bf16.msra.mxu0 0
        %927 = vmatprep.subr.bf16.mxu0 0
        %928 = vmatpush1.bf16.msra.mxu0 0
        %929 = vmatprep.subr.bf16.mxu0 0
        %930 = vmatpush1.bf16.msra.mxu0 0
        %931 = vmatprep.subr.bf16.mxu0 0
        %932 = vmatpush1.bf16.msra.mxu0 0
        %933 = vmatprep.subr.bf16.mxu0 0
        %934 = vmatpush1.bf16.msra.mxu0 0
        %935 = vmatprep.subr.bf16.mxu0 0
        %936 = vmatpush1.bf16.msra.mxu0 0
        %937 = vmatprep.subr.bf16.mxu0 0
        %938 = vmatpush1.bf16.msra.mxu0 0
        %939 = vmatprep.subr.bf16.mxu0 0
        %940 = vmatpush1.bf16.msra.mxu0 0
        %941 = vmatprep.subr.bf16.mxu0 0
        %942 = vmatpush1.bf16.msra.mxu0 0
        %943 = vmatprep.subr.bf16.mxu0 0
        %944 = vmatpush1.bf16.msra.mxu0 0
        %945 = vmatprep.mubr.bf16.mxu0 0
        %946 = vmatmul.mubr.bf16.gmra.mrb[0].mxu0 %v905
        %v947 = vpop.f32.mrb[0].mxu0
        %v948 = vadd.f32 0.0, %v947
        %v949 = vpop.f32.mrb[0].mxu0
        %v950 = vadd.f32 0.0, %v949
        %v951 = vpop.f32.mrb[0].mxu0
        %v952 = vpop.f32.mrb[0].mxu0
        %953 = vdwg.mxu0
        %v954 = vadd.f32 %v848, %v948
        %v955 = vadd.f32 %v849, %v950
        %v956 = vld [vmem:[#allocation2] sm:$0x3f]
        %v957 = vlaneseq
        %v958 = vshrl.u32 %v957, 7
        %v959 = vsub.s32 3, %v958
        %v960 = vrot.slane %v254, %v959
        %v961 = vlaneseq
        %v962 = vshrl.u32 %v961, 7
        %v963 = vsub.s32 3, %v962
        %v964 = vrot.slane %v261, %v963
        %v967 = vcombine.low %v960, %v964
        %v969 = vunpack.c.l.s4 1983009808
        %v970 = vunpack.c.0.s8 %v969
        %v971 = vlaneseq
        %v972 = vshrl.u32 %v971, 7
        %v973 = vsub.s32 %v970, %v972
        %v974 = vrot.slane %v967, %v973
        %975 = vrot.lane.b32.xlu0 %v974, 33
        %v976 = vpop.permute.xlu0 %975
        %v977 = vrot.slane %v976, 6
        %vm978 = vcmask 269312
        %v979 = vsel %vm978, %v977, %v976
        %v981 = vmul.bf16 %v956, %v979
        %s982 = scalar_lea.vmem %s1, 28
        %v983 = vld [vmem:[%s982] sm:$0xf]
        %v985 = vcombine.high %v981, %v981
        %v987 = vunpack.c.l.s4 1983009808
        %v988 = vunpack.c.0.s8 %v987
        %v989 = vlaneseq
        %v990 = vshrl.u32 %v989, 7
        %v991 = vsub.s32 %v988, %v990
        %v992 = vrot.slane %v981, %v991
        %v994 = vunpack.c.l.s4 1983009808
        %v995 = vunpack.c.0.s8 %v994
        %v996 = vlaneseq
        %v997 = vshrl.u32 %v996, 7
        %v998 = vsub.s32 %v995, %v997
        %v999 = vrot.slane %v985, %v998
        %v1000 = vcombine.high %v992, %v992
        %1001 = vrot.lane.b32.xlu0 %v992, 95
        %v1002 = vpop.permute.xlu0 %1001
        %1003 = vrot.lane.b32.xlu0 %v1000, 95
        %v1004 = vpop.permute.xlu0 %1003
        %1005 = vrot.lane.b32.xlu0 %v999, 95
        %v1006 = vpop.permute.xlu0 %1005
        %vm1007 = vcmask 777216
        %v1008 = vsel %vm1007, %v1002, %v1004
        %v1009 = vsel %vm1007, %v1004, %v1006
        %v1011 = vsel %vm340, %v983, 0
        %v1014 = vsel %vm344, %v1008, 0
        %v1017 = vsel %vm344, %v1009, 0
        %1019 = vmatprep.subr.bf16.mxu0 %v1017
        %1020 = vmatpush1.bf16.msra.mxu0 %v1014
        %1021 = vmatprep.subr.bf16.mxu0 0
        %1022 = vmatpush1.bf16.msra.mxu0 0
        %1023 = vmatprep.subr.bf16.mxu0 0
        %1024 = vmatpush1.bf16.msra.mxu0 0
        %1025 = vmatprep.subr.bf16.mxu0 0
        %1026 = vmatpush1.bf16.msra.mxu0 0
        %1027 = vmatprep.subr.bf16.mxu0 0
        %1028 = vmatpush1.bf16.msra.mxu0 0
        %1029 = vmatprep.subr.bf16.mxu0 0
        %1030 = vmatpush1.bf16.msra.mxu0 0
        %1031 = vmatprep.subr.bf16.mxu0 0
        %1032 = vmatpush1.bf16.msra.mxu0 0
        %1033 = vmatprep.subr.bf16.mxu0 0
        %1034 = vmatpush1.bf16.msra.mxu0 0
        %1035 = vmatprep.subr.bf16.mxu0 0
        %1036 = vmatpush1.bf16.msra.mxu0 0
        %1037 = vmatprep.subr.bf16.mxu0 0
        %1038 = vmatpush1.bf16.msra.mxu0 0
        %1039 = vmatprep.subr.bf16.mxu0 0
        %1040 = vmatpush1.bf16.msra.mxu0 0
        %1041 = vmatprep.subr.bf16.mxu0 0
        %1042 = vmatpush1.bf16.msra.mxu0 0
        %1043 = vmatprep.subr.bf16.mxu0 0
        %1044 = vmatpush1.bf16.msra.mxu0 0
        %1045 = vmatprep.subr.bf16.mxu0 0
        %1046 = vmatpush1.bf16.msra.mxu0 0
        %1047 = vmatprep.subr.bf16.mxu0 0
        %1048 = vmatpush1.bf16.msra.mxu0 0
        %1049 = vmatprep.subr.bf16.mxu0 0
        %1050 = vmatpush1.bf16.msra.mxu0 0
        %1051 = vmatprep.mubr.bf16.mxu0 0
        %1052 = vmatmul.mubr.bf16.gmra.mrb[0].mxu0 %v1011
        %v1053 = vpop.f32.mrb[0].mxu0
        %v1054 = vadd.f32 0.0, %v1053
        %v1055 = vpop.f32.mrb[0].mxu0
        %v1056 = vadd.f32 0.0, %v1055
        %v1057 = vpop.f32.mrb[0].mxu0
        %v1058 = vpop.f32.mrb[0].mxu0
        %1059 = vdwg.mxu0
        %v1060 = vadd.f32 %v954, %v1054
        %v1061 = vadd.f32 %v955, %v1056
        %v1062 = vld [vmem:[#allocation2] sm:$0x3f]
        %v1063 = vlaneseq
        %v1064 = vshrl.u32 %v1063, 7
        %v1065 = vsub.s32 3, %v1064
        %v1066 = vrot.slane %v282, %v1065
        %v1067 = vlaneseq
        %v1068 = vshrl.u32 %v1067, 7
        %v1069 = vsub.s32 3, %v1068
        %v1070 = vrot.slane %v289, %v1069
        %v1073 = vcombine.low %v1066, %v1070
        %v1075 = vunpack.c.l.s4 1983009808
        %v1076 = vunpack.c.0.s8 %v1075
        %v1077 = vlaneseq
        %v1078 = vshrl.u32 %v1077, 7
        %v1079 = vsub.s32 %v1076, %v1078
        %v1080 = vrot.slane %v1073, %v1079
        %1081 = vrot.lane.b32.xlu0 %v1080, 34
        %v1082 = vpop.permute.xlu0 %1081
        %v1083 = vrot.slane %v1082, 6
        %vm1084 = vcmask 277504
        %v1085 = vsel %vm1084, %v1083, %v1082
        %v1087 = vmul.bf16 %v1062, %v1085
        %s1088 = scalar_lea.vmem %s1, 32
        %v1089 = vld [vmem:[%s1088] sm:$0xf]
        %v1091 = vcombine.high %v1087, %v1087
        %v1093 = vunpack.c.l.s4 1983009808
        %v1094 = vunpack.c.0.s8 %v1093
        %v1095 = vlaneseq
        %v1096 = vshrl.u32 %v1095, 7
        %v1097 = vsub.s32 %v1094, %v1096
        %v1098 = vrot.slane %v1087, %v1097
        %v1100 = vunpack.c.l.s4 1983009808
        %v1101 = vunpack.c.0.s8 %v1100
        %v1102 = vlaneseq
        %v1103 = vshrl.u32 %v1102, 7
        %v1104 = vsub.s32 %v1101, %v1103
        %v1105 = vrot.slane %v1091, %v1104
        %v1106 = vcombine.high %v1098, %v1098
        %1107 = vrot.lane.b32.xlu0 %v1098, 94
        %v1108 = vpop.permute.xlu0 %1107
        %1109 = vrot.lane.b32.xlu0 %v1106, 94
        %v1110 = vpop.permute.xlu0 %1109
        %1111 = vrot.lane.b32.xlu0 %v1105, 94
        %v1112 = vpop.permute.xlu0 %1111
        %vm1113 = vcmask 769024
        %v1114 = vsel %vm1113, %v1108, %v1110
        %v1115 = vsel %vm1113, %v1110, %v1112
        %v1117 = vsel %vm340, %v1089, 0
        %v1120 = vsel %vm344, %v1114, 0
        %v1123 = vsel %vm344, %v1115, 0
        %1125 = vmatprep.subr.bf16.mxu0 %v1123
        %1126 = vmatpush1.bf16.msra.mxu0 %v1120
        %1127 = vmatprep.subr.bf16.mxu0 0
        %1128 = vmatpush1.bf16.msra.mxu0 0
        %1129 = vmatprep.subr.bf16.mxu0 0
        %1130 = vmatpush1.bf16.msra.mxu0 0
        %1131 = vmatprep.subr.bf16.mxu0 0
        %1132 = vmatpush1.bf16.msra.mxu0 0
        %1133 = vmatprep.subr.bf16.mxu0 0
        %1134 = vmatpush1.bf16.msra.mxu0 0
        %1135 = vmatprep.subr.bf16.mxu0 0
        %1136 = vmatpush1.bf16.msra.mxu0 0
        %1137 = vmatprep.subr.bf16.mxu0 0
        %1138 = vmatpush1.bf16.msra.mxu0 0
        %1139 = vmatprep.subr.bf16.mxu0 0
        %1140 = vmatpush1.bf16.msra.mxu0 0
        %1141 = vmatprep.subr.bf16.mxu0 0
        %1142 = vmatpush1.bf16.msra.mxu0 0
        %1143 = vmatprep.subr.bf16.mxu0 0
        %1144 = vmatpush1.bf16.msra.mxu0 0
        %1145 = vmatprep.subr.bf16.mxu0 0
        %1146 = vmatpush1.bf16.msra.mxu0 0
        %1147 = vmatprep.subr.bf16.mxu0 0
        %1148 = vmatpush1.bf16.msra.mxu0 0
        %1149 = vmatprep.subr.bf16.mxu0 0
        %1150 = vmatpush1.bf16.msra.mxu0 0
        %1151 = vmatprep.subr.bf16.mxu0 0
        %1152 = vmatpush1.bf16.msra.mxu0 0
        %1153 = vmatprep.subr.bf16.mxu0 0
        %1154 = vmatpush1.bf16.msra.mxu0 0
        %1155 = vmatprep.subr.bf16.mxu0 0
        %1156 = vmatpush1.bf16.msra.mxu0 0
        %1157 = vmatprep.mubr.bf16.mxu0 0
        %1158 = vmatmul.mubr.bf16.gmra.mrb[0].mxu0 %v1117
        %v1159 = vpop.f32.mrb[0].mxu0
        %v1160 = vadd.f32 0.0, %v1159
        %v1161 = vpop.f32.mrb[0].mxu0
        %v1162 = vadd.f32 0.0, %v1161
        %v1163 = vpop.f32.mrb[0].mxu0
        %v1164 = vpop.f32.mrb[0].mxu0
        %1165 = vdwg.mxu0
        %v1166 = vadd.f32 %v1060, %v1160
        %v1167 = vadd.f32 %v1061, %v1162
        %vm1168 = vcmp.gt.f32.partialorder %v1166, 0.0
        %vm1169 = vcmp.gt.f32.partialorder %v1167, 0.0
        %v1170 = vmul.f32 %v1166, 0.2
        %v1171 = vmul.f32 %v1167, 0.2
        %v1172 = vsel %vm1168, %v1166, %v1170
        %v1173 = vsel %vm1169, %v1167, %v1171
        %v1174 = vpack.c.bf16 %v1172, %v1172
        %v1175 = vpack.c.bf16 %v1173, %v1173
        %v1178 = vunpack.c.l.b16 %v1174
        %v1179 = vunpack.c.l.b16 %v1175
        %v1180 = vpack.c.b16 %v1179, %v1178
        %1181 = vrot.lane.b32.xlu0 %v1180, 17
        %v1182 = vpop.permute.xlu0 %1181
        %v1183 = vrot.slane %v1182, 4
        %v1184 = vsel %vm237, %v1183, %v1182
        %vm1187 = vcmask 1043592
        %vm1188 = vcmask 1047556
        %vm1189 = vmor %vm1188, %vm1187
        %1190 = vst.msk [vmem:[#allocation3] sm:$0xff] %vm1189, %v1184
        %1191 = vst.msk [vmem:[#allocation3 + $0x8] sm:$0xf] %vm228, %v1183
        %v1192 = vld [vmem:[#allocation3] sm:$0xff]
        %v1193 = vunpack.c.l.b16 %v259
        %v1194 = vunpack.c.l.b16 %v266
        %v1195 = vpack.c.b16 %v1194, %v1193
        %v1197 = vmul.bf16 %v1192, %v1195
        %v1198 = vld [vmem:[%s2] sm:$0xf]
        %v1199 = vld [vmem:[#allocation3 + $0x8] sm:$0xf]
        %v1200 = vunpack.c.l.b16 %v287
        %v1201 = vunpack.c.l.b16 %v294
        %v1202 = vpack.c.b16 %v1201, %v1200
        %1203 = vrot.lane.b32.xlu0 %v1202, 1
        %v1204 = vpop.permute.xlu0 %1203
        %v1205 = vrot.slane %v1204, 4
        %v1206 = vsel %vm308, %v1205, %v1204
        %v1209 = vmul.bf16 %v1192, %v1206
        %v1210 = vmul.bf16 %v1199, %v1205
        %s1211 = scalar_lea.vmem %s2, 4
        %v1212 = vld [vmem:[%s1211] sm:$0xf]
        %v1215 = vunpack.c.l.b16 %v1209
        %v1216 = vunpack.c.h.b16 %v1209
        %v1217 = vunpack.c.l.b16 %v1210
        %v1218 = vpack.c.b16 %v1215, %v1215
        %v1219 = vpack.c.b16 %v1216, %v1216
        %v1220 = vpack.c.b16 %v1217, %v1217
        %1221 = vrot.lane.b32.xlu0 %v1218, 127
        %v1222 = vpop.permute.xlu0 %1221
        %1223 = vrot.lane.b32.xlu0 %v1219, 127
        %v1224 = vpop.permute.xlu0 %1223
        %1225 = vrot.lane.b32.xlu0 %v1220, 127
        %v1226 = vpop.permute.xlu0 %1225
        %v1227 = vsel %vm337, %v1222, %v1224
        %v1228 = vsel %vm337, %v1224, %v1226
        %vm1229 = vcmask 64512
        %v1231 = vsel %vm1229, %v1212, 0
        %vm1233 = vcmask 1043456
        %v1235 = vsel %vm1233, %v1227, 0
        %v1238 = vsel %vm1233, %v1228, 0
        %1240 = vmatprep.subr.bf16.mxu0 %v1238
        %1241 = vmatpush1.bf16.msra.mxu0 %v1235
        %1242 = vmatprep.subr.bf16.mxu0 0
        %1243 = vmatpush1.bf16.msra.mxu0 0
        %1244 = vmatprep.subr.bf16.mxu0 0
        %1245 = vmatpush1.bf16.msra.mxu0 0
        %1246 = vmatprep.subr.bf16.mxu0 0
        %1247 = vmatpush1.bf16.msra.mxu0 0
        %1248 = vmatprep.subr.bf16.mxu0 0
        %1249 = vmatpush1.bf16.msra.mxu0 0
        %1250 = vmatprep.subr.bf16.mxu0 0
        %1251 = vmatpush1.bf16.msra.mxu0 0
        %1252 = vmatprep.subr.bf16.mxu0 0
        %1253 = vmatpush1.bf16.msra.mxu0 0
        %1254 = vmatprep.subr.bf16.mxu0 0
        %1255 = vmatpush1.bf16.msra.mxu0 0
        %1256 = vmatprep.subr.bf16.mxu0 0
        %1257 = vmatpush1.bf16.msra.mxu0 0
        %1258 = vmatprep.subr.bf16.mxu0 0
        %1259 = vmatpush1.bf16.msra.mxu0 0
        %1260 = vmatprep.subr.bf16.mxu0 0
        %1261 = vmatpush1.bf16.msra.mxu0 0
        %1262 = vmatprep.subr.bf16.mxu0 0
        %1263 = vmatpush1.bf16.msra.mxu0 0
        %1264 = vmatprep.subr.bf16.mxu0 0
        %1265 = vmatpush1.bf16.msra.mxu0 0
        %1266 = vmatprep.subr.bf16.mxu0 0
        %1267 = vmatpush1.bf16.msra.mxu0 0
        %1268 = vmatprep.subr.bf16.mxu0 0
        %1269 = vmatpush1.bf16.msra.mxu0 0
        %1270 = vmatprep.subr.bf16.mxu0 0
        %1271 = vmatpush1.bf16.msra.mxu0 0
        %1272 = vmatprep.mubr.bf16.mxu0 0
        %1273 = vmatmul.mubr.bf16.gmra.mrb[0].mxu0 %v1231
        %v1274 = vpop.f32.mrb[0].mxu0
        %v1275 = vadd.f32 0.0, %v1274
        %v1276 = vpop.f32.mrb[0].mxu0
        %v1277 = vadd.f32 0.0, %v1276
        %v1278 = vpop.f32.mrb[0].mxu0
        %v1279 = vpop.f32.mrb[0].mxu0
        %1280 = vdwg.mxu0
        %v1282 = vunpack.c.l.b16 %v1197
        %v1283 = vunpack.c.h.b16 %v1197
        %v1284 = vpack.c.b16 %v1282, %v1282
        %v1285 = vpack.c.b16 %v1283, %v1283
        %v1287 = vsel %vm1229, %v1198, 0
        %v1290 = vsel %vm1233, %v1284, 0
        %v1293 = vsel %vm1233, %v1285, 0
        %1295 = vmatprep.subr.bf16.mxu0 %v1293
        %1296 = vmatpush1.bf16.msra.mxu0 %v1290
        %1297 = vmatprep.subr.bf16.mxu0 0
        %1298 = vmatpush1.bf16.msra.mxu0 0
        %1299 = vmatprep.subr.bf16.mxu0 0
        %1300 = vmatpush1.bf16.msra.mxu0 0
        %1301 = vmatprep.subr.bf16.mxu0 0
        %1302 = vmatpush1.bf16.msra.mxu0 0
        %1303 = vmatprep.subr.bf16.mxu0 0
        %1304 = vmatpush1.bf16.msra.mxu0 0
        %1305 = vmatprep.subr.bf16.mxu0 0
        %1306 = vmatpush1.bf16.msra.mxu0 0
        %1307 = vmatprep.subr.bf16.mxu0 0
        %1308 = vmatpush1.bf16.msra.mxu0 0
        %1309 = vmatprep.subr.bf16.mxu0 0
        %1310 = vmatpush1.bf16.msra.mxu0 0
        %1311 = vmatprep.subr.bf16.mxu0 0
        %1312 = vmatpush1.bf16.msra.mxu0 0
        %1313 = vmatprep.subr.bf16.mxu0 0
        %1314 = vmatpush1.bf16.msra.mxu0 0
        %1315 = vmatprep.subr.bf16.mxu0 0
        %1316 = vmatpush1.bf16.msra.mxu0 0
        %1317 = vmatprep.subr.bf16.mxu0 0
        %1318 = vmatpush1.bf16.msra.mxu0 0
        %1319 = vmatprep.subr.bf16.mxu0 0
        %1320 = vmatpush1.bf16.msra.mxu0 0
        %1321 = vmatprep.subr.bf16.mxu0 0
        %1322 = vmatpush1.bf16.msra.mxu0 0
        %1323 = vmatprep.subr.bf16.mxu0 0
        %1324 = vmatpush1.bf16.msra.mxu0 0
        %1325 = vmatprep.subr.bf16.mxu0 0
        %1326 = vmatpush1.bf16.msra.mxu0 0
        %1327 = vmatprep.mubr.bf16.mxu0 0
        %1328 = vmatmul.mubr.bf16.gmra.mrb[0].mxu0 %v1287
        %v1329 = vpop.f32.mrb[0].mxu0
        %v1330 = vadd.f32 %v1275, %v1329
        %v1331 = vpop.f32.mrb[0].mxu0
        %v1332 = vadd.f32 %v1277, %v1331
        %v1333 = vpop.f32.mrb[0].mxu0
        %v1334 = vpop.f32.mrb[0].mxu0
        %1335 = vdwg.mxu0
        %v1336 = vunpack.c.l.b16 %v455
        %v1337 = vunpack.c.l.b16 %v459
        %v1338 = vpack.c.b16 %v1337, %v1336
        %1339 = vrot.lane.b32.xlu0 %v1338, 2
        %v1340 = vpop.permute.xlu0 %1339
        %v1341 = vrot.slane %v1340, 4
        %v1342 = vsel %vm473, %v1341, %v1340
        %v1345 = vmul.bf16 %v1192, %v1342
        %v1346 = vmul.bf16 %v1199, %v1341
        %s1347 = scalar_lea.vmem %s2, 8
        %v1348 = vld [vmem:[%s1347] sm:$0xf]
        %v1351 = vunpack.c.l.b16 %v1345
        %v1352 = vunpack.c.h.b16 %v1345
        %v1353 = vunpack.c.l.b16 %v1346
        %v1354 = vpack.c.b16 %v1351, %v1351
        %v1355 = vpack.c.b16 %v1352, %v1352
        %v1356 = vpack.c.b16 %v1353, %v1353
        %1357 = vrot.lane.b32.xlu0 %v1354, 126
        %v1358 = vpop.permute.xlu0 %1357
        %1359 = vrot.lane.b32.xlu0 %v1355, 126
        %v1360 = vpop.permute.xlu0 %1359
        %1361 = vrot.lane.b32.xlu0 %v1356, 126
        %v1362 = vpop.permute.xlu0 %1361
        %v1363 = vsel %vm502, %v1358, %v1360
        %v1364 = vsel %vm502, %v1360, %v1362
        %v1366 = vsel %vm1229, %v1348, 0
        %v1369 = vsel %vm1233, %v1363, 0
        %v1372 = vsel %vm1233, %v1364, 0
        %1374 = vmatprep.subr.bf16.mxu0 %v1372
        %1375 = vmatpush1.bf16.msra.mxu0 %v1369
        %1376 = vmatprep.subr.bf16.mxu0 0
        %1377 = vmatpush1.bf16.msra.mxu0 0
        %1378 = vmatprep.subr.bf16.mxu0 0
        %1379 = vmatpush1.bf16.msra.mxu0 0
        %1380 = vmatprep.subr.bf16.mxu0 0
        %1381 = vmatpush1.bf16.msra.mxu0 0
        %1382 = vmatprep.subr.bf16.mxu0 0
        %1383 = vmatpush1.bf16.msra.mxu0 0
        %1384 = vmatprep.subr.bf16.mxu0 0
        %1385 = vmatpush1.bf16.msra.mxu0 0
        %1386 = vmatprep.subr.bf16.mxu0 0
        %1387 = vmatpush1.bf16.msra.mxu0 0
        %1388 = vmatprep.subr.bf16.mxu0 0
        %1389 = vmatpush1.bf16.msra.mxu0 0
        %1390 = vmatprep.subr.bf16.mxu0 0
        %1391 = vmatpush1.bf16.msra.mxu0 0
        %1392 = vmatprep.subr.bf16.mxu0 0
        %1393 = vmatpush1.bf16.msra.mxu0 0
        %1394 = vmatprep.subr.bf16.mxu0 0
        %1395 = vmatpush1.bf16.msra.mxu0 0
        %1396 = vmatprep.subr.bf16.mxu0 0
        %1397 = vmatpush1.bf16.msra.mxu0 0
        %1398 = vmatprep.subr.bf16.mxu0 0
        %1399 = vmatpush1.bf16.msra.mxu0 0
        %1400 = vmatprep.subr.bf16.mxu0 0
        %1401 = vmatpush1.bf16.msra.mxu0 0
        %1402 = vmatprep.subr.bf16.mxu0 0
        %1403 = vmatpush1.bf16.msra.mxu0 0
        %1404 = vmatprep.subr.bf16.mxu0 0
        %1405 = vmatpush1.bf16.msra.mxu0 0
        %1406 = vmatprep.mubr.bf16.mxu0 0
        %1407 = vmatmul.mubr.bf16.gmra.mrb[0].mxu0 %v1366
        %v1408 = vpop.f32.mrb[0].mxu0
        %v1409 = vadd.f32 0.0, %v1408
        %v1410 = vpop.f32.mrb[0].mxu0
        %v1411 = vadd.f32 0.0, %v1410
        %v1412 = vpop.f32.mrb[0].mxu0
        %v1413 = vpop.f32.mrb[0].mxu0
        %1414 = vdwg.mxu0
        %v1415 = vadd.f32 %v1330, %v1409
        %v1416 = vadd.f32 %v1332, %v1411
        %v1417 = vunpack.c.l.b16 %v561
        %v1418 = vunpack.c.l.b16 %v565
        %v1419 = vpack.c.b16 %v1418, %v1417
        %1420 = vrot.lane.b32.xlu0 %v1419, 16
        %v1421 = vpop.permute.xlu0 %1420
        %v1422 = vrot.slane %v1421, 4
        %v1423 = vsel %vm579, %v1422, %v1421
        %v1426 = vmul.bf16 %v1192, %v1423
        %v1427 = vmul.bf16 %v1199, %v1422
        %s1428 = scalar_lea.vmem %s2, 12
        %v1429 = vld [vmem:[%s1428] sm:$0xf]
        %v1432 = vunpack.c.l.b16 %v1426
        %v1433 = vunpack.c.h.b16 %v1426
        %v1434 = vunpack.c.l.b16 %v1427
        %v1435 = vpack.c.b16 %v1432, %v1432
        %v1436 = vpack.c.b16 %v1433, %v1433
        %v1437 = vpack.c.b16 %v1434, %v1434
        %1438 = vrot.lane.b32.xlu0 %v1435, 112
        %v1439 = vpop.permute.xlu0 %1438
        %1440 = vrot.lane.b32.xlu0 %v1436, 112
        %v1441 = vpop.permute.xlu0 %1440
        %1442 = vrot.lane.b32.xlu0 %v1437, 112
        %v1443 = vpop.permute.xlu0 %1442
        %v1444 = vsel %vm608, %v1439, %v1441
        %v1445 = vsel %vm608, %v1441, %v1443
        %v1447 = vsel %vm1229, %v1429, 0
        %v1450 = vsel %vm1233, %v1444, 0
        %v1453 = vsel %vm1233, %v1445, 0
        %1455 = vmatprep.subr.bf16.mxu0 %v1453
        %1456 = vmatpush1.bf16.msra.mxu0 %v1450
        %1457 = vmatprep.subr.bf16.mxu0 0
        %1458 = vmatpush1.bf16.msra.mxu0 0
        %1459 = vmatprep.subr.bf16.mxu0 0
        %1460 = vmatpush1.bf16.msra.mxu0 0
        %1461 = vmatprep.subr.bf16.mxu0 0
        %1462 = vmatpush1.bf16.msra.mxu0 0
        %1463 = vmatprep.subr.bf16.mxu0 0
        %1464 = vmatpush1.bf16.msra.mxu0 0
        %1465 = vmatprep.subr.bf16.mxu0 0
        %1466 = vmatpush1.bf16.msra.mxu0 0
        %1467 = vmatprep.subr.bf16.mxu0 0
        %1468 = vmatpush1.bf16.msra.mxu0 0
        %1469 = vmatprep.subr.bf16.mxu0 0
        %1470 = vmatpush1.bf16.msra.mxu0 0
        %1471 = vmatprep.subr.bf16.mxu0 0
        %1472 = vmatpush1.bf16.msra.mxu0 0
        %1473 = vmatprep.subr.bf16.mxu0 0
        %1474 = vmatpush1.bf16.msra.mxu0 0
        %1475 = vmatprep.subr.bf16.mxu0 0
        %1476 = vmatpush1.bf16.msra.mxu0 0
        %1477 = vmatprep.subr.bf16.mxu0 0
        %1478 = vmatpush1.bf16.msra.mxu0 0
        %1479 = vmatprep.subr.bf16.mxu0 0
        %1480 = vmatpush1.bf16.msra.mxu0 0
        %1481 = vmatprep.subr.bf16.mxu0 0
        %1482 = vmatpush1.bf16.msra.mxu0 0
        %1483 = vmatprep.subr.bf16.mxu0 0
        %1484 = vmatpush1.bf16.msra.mxu0 0
        %1485 = vmatprep.subr.bf16.mxu0 0
        %1486 = vmatpush1.bf16.msra.mxu0 0
        %1487 = vmatprep.mubr.bf16.mxu0 0
        %1488 = vmatmul.mubr.bf16.gmra.mrb[0].mxu0 %v1447
        %v1489 = vpop.f32.mrb[0].mxu0
        %v1490 = vadd.f32 0.0, %v1489
        %v1491 = vpop.f32.mrb[0].mxu0
        %v1492 = vadd.f32 0.0, %v1491
        %v1493 = vpop.f32.mrb[0].mxu0
        %v1494 = vpop.f32.mrb[0].mxu0
        %1495 = vdwg.mxu0
        %v1496 = vadd.f32 %v1415, %v1490
        %v1497 = vadd.f32 %v1416, %v1492
        %s1498 = scalar_lea.vmem %s2, 16
        %v1499 = vld [vmem:[%s1498] sm:$0xf]
        %v1502 = vunpack.c.l.b16 %v1192
        %v1503 = vunpack.c.h.b16 %v1192
        %v1504 = vunpack.c.l.b16 %v1199
        %v1505 = vpack.c.b16 %v1502, %v1502
        %v1506 = vpack.c.b16 %v1503, %v1503
        %v1507 = vpack.c.b16 %v1504, %v1504
        %1508 = vrot.lane.b32.xlu0 %v1505, 111
        %v1509 = vpop.permute.xlu0 %1508
        %1510 = vrot.lane.b32.xlu0 %v1506, 111
        %v1511 = vpop.permute.xlu0 %1510
        %1512 = vrot.lane.b32.xlu0 %v1507, 111
        %v1513 = vpop.permute.xlu0 %1512
        %v1514 = vsel %vm689, %v1509, %v1511
        %v1515 = vsel %vm689, %v1511, %v1513
        %v1517 = vsel %vm1229, %v1499, 0
        %v1520 = vsel %vm1233, %v1514, 0
        %v1523 = vsel %vm1233, %v1515, 0
        %1525 = vmatprep.subr.bf16.mxu0 %v1523
        %1526 = vmatpush1.bf16.msra.mxu0 %v1520
        %1527 = vmatprep.subr.bf16.mxu0 0
        %1528 = vmatpush1.bf16.msra.mxu0 0
        %1529 = vmatprep.subr.bf16.mxu0 0
        %1530 = vmatpush1.bf16.msra.mxu0 0
        %1531 = vmatprep.subr.bf16.mxu0 0
        %1532 = vmatpush1.bf16.msra.mxu0 0
        %1533 = vmatprep.subr.bf16.mxu0 0
        %1534 = vmatpush1.bf16.msra.mxu0 0
        %1535 = vmatprep.subr.bf16.mxu0 0
        %1536 = vmatpush1.bf16.msra.mxu0 0
        %1537 = vmatprep.subr.bf16.mxu0 0
        %1538 = vmatpush1.bf16.msra.mxu0 0
        %1539 = vmatprep.subr.bf16.mxu0 0
        %1540 = vmatpush1.bf16.msra.mxu0 0
        %1541 = vmatprep.subr.bf16.mxu0 0
        %1542 = vmatpush1.bf16.msra.mxu0 0
        %1543 = vmatprep.subr.bf16.mxu0 0
        %1544 = vmatpush1.bf16.msra.mxu0 0
        %1545 = vmatprep.subr.bf16.mxu0 0
        %1546 = vmatpush1.bf16.msra.mxu0 0
        %1547 = vmatprep.subr.bf16.mxu0 0
        %1548 = vmatpush1.bf16.msra.mxu0 0
        %1549 = vmatprep.subr.bf16.mxu0 0
        %1550 = vmatpush1.bf16.msra.mxu0 0
        %1551 = vmatprep.subr.bf16.mxu0 0
        %1552 = vmatpush1.bf16.msra.mxu0 0
        %1553 = vmatprep.subr.bf16.mxu0 0
        %1554 = vmatpush1.bf16.msra.mxu0 0
        %1555 = vmatprep.subr.bf16.mxu0 0
        %1556 = vmatpush1.bf16.msra.mxu0 0
        %1557 = vmatprep.mubr.bf16.mxu0 0
        %1558 = vmatmul.mubr.bf16.gmra.mrb[0].mxu0 %v1517
        %v1559 = vpop.f32.mrb[0].mxu0
        %v1560 = vadd.f32 0.0, %v1559
        %v1561 = vpop.f32.mrb[0].mxu0
        %v1562 = vadd.f32 0.0, %v1561
        %v1563 = vpop.f32.mrb[0].mxu0
        %v1564 = vpop.f32.mrb[0].mxu0
        %1565 = vdwg.mxu0
        %v1566 = vadd.f32 %v1496, %v1560
        %v1567 = vadd.f32 %v1497, %v1562
        %v1568 = vunpack.c.l.b16 %v748
        %v1569 = vunpack.c.l.b16 %v752
        %v1570 = vpack.c.b16 %v1569, %v1568
        %1571 = vrot.lane.b32.xlu0 %v1570, 18
        %v1572 = vpop.permute.xlu0 %1571
        %v1573 = vrot.slane %v1572, 4
        %v1574 = vsel %vm766, %v1573, %v1572
        %v1577 = vmul.bf16 %v1192, %v1574
        %v1578 = vmul.bf16 %v1199, %v1573
        %s1579 = scalar_lea.vmem %s2, 20
        %v1580 = vld [vmem:[%s1579] sm:$0xf]
        %v1583 = vunpack.c.l.b16 %v1577
        %v1584 = vunpack.c.h.b16 %v1577
        %v1585 = vunpack.c.l.b16 %v1578
        %v1586 = vpack.c.b16 %v1583, %v1583
        %v1587 = vpack.c.b16 %v1584, %v1584
        %v1588 = vpack.c.b16 %v1585, %v1585
        %1589 = vrot.lane.b32.xlu0 %v1586, 110
        %v1590 = vpop.permute.xlu0 %1589
        %1591 = vrot.lane.b32.xlu0 %v1587, 110
        %v1592 = vpop.permute.xlu0 %1591
        %1593 = vrot.lane.b32.xlu0 %v1588, 110
        %v1594 = vpop.permute.xlu0 %1593
        %v1595 = vsel %vm795, %v1590, %v1592
        %v1596 = vsel %vm795, %v1592, %v1594
        %v1598 = vsel %vm1229, %v1580, 0
        %v1601 = vsel %vm1233, %v1595, 0
        %v1604 = vsel %vm1233, %v1596, 0
        %1606 = vmatprep.subr.bf16.mxu0 %v1604
        %1607 = vmatpush1.bf16.msra.mxu0 %v1601
        %1608 = vmatprep.subr.bf16.mxu0 0
        %1609 = vmatpush1.bf16.msra.mxu0 0
        %1610 = vmatprep.subr.bf16.mxu0 0
        %1611 = vmatpush1.bf16.msra.mxu0 0
        %1612 = vmatprep.subr.bf16.mxu0 0
        %1613 = vmatpush1.bf16.msra.mxu0 0
        %1614 = vmatprep.subr.bf16.mxu0 0
        %1615 = vmatpush1.bf16.msra.mxu0 0
        %1616 = vmatprep.subr.bf16.mxu0 0
        %1617 = vmatpush1.bf16.msra.mxu0 0
        %1618 = vmatprep.subr.bf16.mxu0 0
        %1619 = vmatpush1.bf16.msra.mxu0 0
        %1620 = vmatprep.subr.bf16.mxu0 0
        %1621 = vmatpush1.bf16.msra.mxu0 0
        %1622 = vmatprep.subr.bf16.mxu0 0
        %1623 = vmatpush1.bf16.msra.mxu0 0
        %1624 = vmatprep.subr.bf16.mxu0 0
        %1625 = vmatpush1.bf16.msra.mxu0 0
        %1626 = vmatprep.subr.bf16.mxu0 0
        %1627 = vmatpush1.bf16.msra.mxu0 0
        %1628 = vmatprep.subr.bf16.mxu0 0
        %1629 = vmatpush1.bf16.msra.mxu0 0
        %1630 = vmatprep.subr.bf16.mxu0 0
        %1631 = vmatpush1.bf16.msra.mxu0 0
        %1632 = vmatprep.subr.bf16.mxu0 0
        %1633 = vmatpush1.bf16.msra.mxu0 0
        %1634 = vmatprep.subr.bf16.mxu0 0
        %1635 = vmatpush1.bf16.msra.mxu0 0
        %1636 = vmatprep.subr.bf16.mxu0 0
        %1637 = vmatpush1.bf16.msra.mxu0 0
        %1638 = vmatprep.mubr.bf16.mxu0 0
        %1639 = vmatmul.mubr.bf16.gmra.mrb[0].mxu0 %v1598
        %v1640 = vpop.f32.mrb[0].mxu0
        %v1641 = vadd.f32 0.0, %v1640
        %v1642 = vpop.f32.mrb[0].mxu0
        %v1643 = vadd.f32 0.0, %v1642
        %v1644 = vpop.f32.mrb[0].mxu0
        %v1645 = vpop.f32.mrb[0].mxu0
        %1646 = vdwg.mxu0
        %v1647 = vadd.f32 %v1566, %v1641
        %v1648 = vadd.f32 %v1567, %v1643
        %v1649 = vunpack.c.l.b16 %v854
        %v1650 = vunpack.c.l.b16 %v858
        %v1651 = vpack.c.b16 %v1650, %v1649
        %1652 = vrot.lane.b32.xlu0 %v1651, 32
        %v1653 = vpop.permute.xlu0 %1652
        %v1654 = vrot.slane %v1653, 4
        %v1655 = vsel %vm872, %v1654, %v1653
        %v1658 = vmul.bf16 %v1192, %v1655
        %v1659 = vmul.bf16 %v1199, %v1654
        %s1660 = scalar_lea.vmem %s2, 24
        %v1661 = vld [vmem:[%s1660] sm:$0xf]
        %v1664 = vunpack.c.l.b16 %v1658
        %v1665 = vunpack.c.h.b16 %v1658
        %v1666 = vunpack.c.l.b16 %v1659
        %v1667 = vpack.c.b16 %v1664, %v1664
        %v1668 = vpack.c.b16 %v1665, %v1665
        %v1669 = vpack.c.b16 %v1666, %v1666
        %1670 = vrot.lane.b32.xlu0 %v1667, 96
        %v1671 = vpop.permute.xlu0 %1670
        %1672 = vrot.lane.b32.xlu0 %v1668, 96
        %v1673 = vpop.permute.xlu0 %1672
        %1674 = vrot.lane.b32.xlu0 %v1669, 96
        %v1675 = vpop.permute.xlu0 %1674
        %v1676 = vsel %vm901, %v1671, %v1673
        %v1677 = vsel %vm901, %v1673, %v1675
        %v1679 = vsel %vm1229, %v1661, 0
        %v1682 = vsel %vm1233, %v1676, 0
        %v1685 = vsel %vm1233, %v1677, 0
        %1687 = vmatprep.subr.bf16.mxu0 %v1685
        %1688 = vmatpush1.bf16.msra.mxu0 %v1682
        %1689 = vmatprep.subr.bf16.mxu0 0
        %1690 = vmatpush1.bf16.msra.mxu0 0
        %1691 = vmatprep.subr.bf16.mxu0 0
        %1692 = vmatpush1.bf16.msra.mxu0 0
        %1693 = vmatprep.subr.bf16.mxu0 0
        %1694 = vmatpush1.bf16.msra.mxu0 0
        %1695 = vmatprep.subr.bf16.mxu0 0
        %1696 = vmatpush1.bf16.msra.mxu0 0
        %1697 = vmatprep.subr.bf16.mxu0 0
        %1698 = vmatpush1.bf16.msra.mxu0 0
        %1699 = vmatprep.subr.bf16.mxu0 0
        %1700 = vmatpush1.bf16.msra.mxu0 0
        %1701 = vmatprep.subr.bf16.mxu0 0
        %1702 = vmatpush1.bf16.msra.mxu0 0
        %1703 = vmatprep.subr.bf16.mxu0 0
        %1704 = vmatpush1.bf16.msra.mxu0 0
        %1705 = vmatprep.subr.bf16.mxu0 0
        %1706 = vmatpush1.bf16.msra.mxu0 0
        %1707 = vmatprep.subr.bf16.mxu0 0
        %1708 = vmatpush1.bf16.msra.mxu0 0
        %1709 = vmatprep.subr.bf16.mxu0 0
        %1710 = vmatpush1.bf16.msra.mxu0 0
        %1711 = vmatprep.subr.bf16.mxu0 0
        %1712 = vmatpush1.bf16.msra.mxu0 0
        %1713 = vmatprep.subr.bf16.mxu0 0
        %1714 = vmatpush1.bf16.msra.mxu0 0
        %1715 = vmatprep.subr.bf16.mxu0 0
        %1716 = vmatpush1.bf16.msra.mxu0 0
        %1717 = vmatprep.subr.bf16.mxu0 0
        %1718 = vmatpush1.bf16.msra.mxu0 0
        %1719 = vmatprep.mubr.bf16.mxu0 0
        %1720 = vmatmul.mubr.bf16.gmra.mrb[0].mxu0 %v1679
        %v1721 = vpop.f32.mrb[0].mxu0
        %v1722 = vadd.f32 0.0, %v1721
        %v1723 = vpop.f32.mrb[0].mxu0
        %v1724 = vadd.f32 0.0, %v1723
        %v1725 = vpop.f32.mrb[0].mxu0
        %v1726 = vpop.f32.mrb[0].mxu0
        %1727 = vdwg.mxu0
        %v1728 = vadd.f32 %v1647, %v1722
        %v1729 = vadd.f32 %v1648, %v1724
        %v1730 = vunpack.c.l.b16 %v960
        %v1731 = vunpack.c.l.b16 %v964
        %v1732 = vpack.c.b16 %v1731, %v1730
        %1733 = vrot.lane.b32.xlu0 %v1732, 33
        %v1734 = vpop.permute.xlu0 %1733
        %v1735 = vrot.slane %v1734, 4
        %v1736 = vsel %vm978, %v1735, %v1734
        %v1739 = vmul.bf16 %v1192, %v1736
        %v1740 = vmul.bf16 %v1199, %v1735
        %s1741 = scalar_lea.vmem %s2, 28
        %v1742 = vld [vmem:[%s1741] sm:$0xf]
        %v1745 = vunpack.c.l.b16 %v1739
        %v1746 = vunpack.c.h.b16 %v1739
        %v1747 = vunpack.c.l.b16 %v1740
        %v1748 = vpack.c.b16 %v1745, %v1745
        %v1749 = vpack.c.b16 %v1746, %v1746
        %v1750 = vpack.c.b16 %v1747, %v1747
        %1751 = vrot.lane.b32.xlu0 %v1748, 95
        %v1752 = vpop.permute.xlu0 %1751
        %1753 = vrot.lane.b32.xlu0 %v1749, 95
        %v1754 = vpop.permute.xlu0 %1753
        %1755 = vrot.lane.b32.xlu0 %v1750, 95
        %v1756 = vpop.permute.xlu0 %1755
        %v1757 = vsel %vm1007, %v1752, %v1754
        %v1758 = vsel %vm1007, %v1754, %v1756
        %v1760 = vsel %vm1229, %v1742, 0
        %v1763 = vsel %vm1233, %v1757, 0
        %v1766 = vsel %vm1233, %v1758, 0
        %1768 = vmatprep.subr.bf16.mxu0 %v1766
        %1769 = vmatpush1.bf16.msra.mxu0 %v1763
        %1770 = vmatprep.subr.bf16.mxu0 0
        %1771 = vmatpush1.bf16.msra.mxu0 0
        %1772 = vmatprep.subr.bf16.mxu0 0
        %1773 = vmatpush1.bf16.msra.mxu0 0
        %1774 = vmatprep.subr.bf16.mxu0 0
        %1775 = vmatpush1.bf16.msra.mxu0 0
        %1776 = vmatprep.subr.bf16.mxu0 0
        %1777 = vmatpush1.bf16.msra.mxu0 0
        %1778 = vmatprep.subr.bf16.mxu0 0
        %1779 = vmatpush1.bf16.msra.mxu0 0
        %1780 = vmatprep.subr.bf16.mxu0 0
        %1781 = vmatpush1.bf16.msra.mxu0 0
        %1782 = vmatprep.subr.bf16.mxu0 0
        %1783 = vmatpush1.bf16.msra.mxu0 0
        %1784 = vmatprep.subr.bf16.mxu0 0
        %1785 = vmatpush1.bf16.msra.mxu0 0
        %1786 = vmatprep.subr.bf16.mxu0 0
        %1787 = vmatpush1.bf16.msra.mxu0 0
        %1788 = vmatprep.subr.bf16.mxu0 0
        %1789 = vmatpush1.bf16.msra.mxu0 0
        %1790 = vmatprep.subr.bf16.mxu0 0
        %1791 = vmatpush1.bf16.msra.mxu0 0
        %1792 = vmatprep.subr.bf16.mxu0 0
        %1793 = vmatpush1.bf16.msra.mxu0 0
        %1794 = vmatprep.subr.bf16.mxu0 0
        %1795 = vmatpush1.bf16.msra.mxu0 0
        %1796 = vmatprep.subr.bf16.mxu0 0
        %1797 = vmatpush1.bf16.msra.mxu0 0
        %1798 = vmatprep.subr.bf16.mxu0 0
        %1799 = vmatpush1.bf16.msra.mxu0 0
        %1800 = vmatprep.mubr.bf16.mxu0 0
        %1801 = vmatmul.mubr.bf16.gmra.mrb[0].mxu0 %v1760
        %v1802 = vpop.f32.mrb[0].mxu0
        %v1803 = vadd.f32 0.0, %v1802
        %v1804 = vpop.f32.mrb[0].mxu0
        %v1805 = vadd.f32 0.0, %v1804
        %v1806 = vpop.f32.mrb[0].mxu0
        %v1807 = vpop.f32.mrb[0].mxu0
        %1808 = vdwg.mxu0
        %v1809 = vadd.f32 %v1728, %v1803
        %v1810 = vadd.f32 %v1729, %v1805
        %v1811 = vunpack.c.l.b16 %v1066
        %v1812 = vunpack.c.l.b16 %v1070
        %v1813 = vpack.c.b16 %v1812, %v1811
        %1814 = vrot.lane.b32.xlu0 %v1813, 34
        %v1815 = vpop.permute.xlu0 %1814
        %v1816 = vrot.slane %v1815, 4
        %v1817 = vsel %vm1084, %v1816, %v1815
        %v1820 = vmul.bf16 %v1192, %v1817
        %v1821 = vmul.bf16 %v1199, %v1816
        %s1822 = scalar_lea.vmem %s2, 32
        %v1823 = vld [vmem:[%s1822] sm:$0xf]
        %v1826 = vunpack.c.l.b16 %v1820
        %v1827 = vunpack.c.h.b16 %v1820
        %v1828 = vunpack.c.l.b16 %v1821
        %v1829 = vpack.c.b16 %v1826, %v1826
        %v1830 = vpack.c.b16 %v1827, %v1827
        %v1831 = vpack.c.b16 %v1828, %v1828
        %1832 = vrot.lane.b32.xlu0 %v1829, 94
        %v1833 = vpop.permute.xlu0 %1832
        %1834 = vrot.lane.b32.xlu0 %v1830, 94
        %v1835 = vpop.permute.xlu0 %1834
        %1836 = vrot.lane.b32.xlu0 %v1831, 94
        %v1837 = vpop.permute.xlu0 %1836
        %v1838 = vsel %vm1113, %v1833, %v1835
        %v1839 = vsel %vm1113, %v1835, %v1837
        %v1841 = vsel %vm1229, %v1823, 0
        %v1844 = vsel %vm1233, %v1838, 0
        %v1847 = vsel %vm1233, %v1839, 0
        %1849 = vmatprep.subr.bf16.mxu0 %v1847
        %1850 = vmatpush1.bf16.msra.mxu0 %v1844
        %1851 = vmatprep.subr.bf16.mxu0 0
        %1852 = vmatpush1.bf16.msra.mxu0 0
        %1853 = vmatprep.subr.bf16.mxu0 0
        %1854 = vmatpush1.bf16.msra.mxu0 0
        %1855 = vmatprep.subr.bf16.mxu0 0
        %1856 = vmatpush1.bf16.msra.mxu0 0
        %1857 = vmatprep.subr.bf16.mxu0 0
        %1858 = vmatpush1.bf16.msra.mxu0 0
        %1859 = vmatprep.subr.bf16.mxu0 0
        %1860 = vmatpush1.bf16.msra.mxu0 0
        %1861 = vmatprep.subr.bf16.mxu0 0
        %1862 = vmatpush1.bf16.msra.mxu0 0
        %1863 = vmatprep.subr.bf16.mxu0 0
        %1864 = vmatpush1.bf16.msra.mxu0 0
        %1865 = vmatprep.subr.bf16.mxu0 0
        %1866 = vmatpush1.bf16.msra.mxu0 0
        %1867 = vmatprep.subr.bf16.mxu0 0
        %1868 = vmatpush1.bf16.msra.mxu0 0
        %1869 = vmatprep.subr.bf16.mxu0 0
        %1870 = vmatpush1.bf16.msra.mxu0 0
        %1871 = vmatprep.subr.bf16.mxu0 0
        %1872 = vmatpush1.bf16.msra.mxu0 0
        %1873 = vmatprep.subr.bf16.mxu0 0
        %1874 = vmatpush1.bf16.msra.mxu0 0
        %1875 = vmatprep.subr.bf16.mxu0 0
        %1876 = vmatpush1.bf16.msra.mxu0 0
        %1877 = vmatprep.subr.bf16.mxu0 0
        %1878 = vmatpush1.bf16.msra.mxu0 0
        %1879 = vmatprep.subr.bf16.mxu0 0
        %1880 = vmatpush1.bf16.msra.mxu0 0
        %1881 = vmatprep.mubr.bf16.mxu0 0
        %1882 = vmatmul.mubr.bf16.gmra.mrb[0].mxu0 %v1841
        %v1883 = vpop.f32.mrb[0].mxu0
        %v1884 = vadd.f32 0.0, %v1883
        %v1885 = vpop.f32.mrb[0].mxu0
        %v1886 = vadd.f32 0.0, %v1885
        %v1887 = vpop.f32.mrb[0].mxu0
        %v1888 = vpop.f32.mrb[0].mxu0
        %1889 = vdwg.mxu0
        %v1890 = vadd.f32 %v1809, %v1884
        %v1891 = vadd.f32 %v1810, %v1886
        %v1892 = vld [vmem:[%s3] sm:$0xf]
        %v1893 = vld [vmem:[#allocation2] sm:$0x3f]
        %v1895 = vcombine.high %v1893, %v1893
        %v1897 = vunpack.c.l.s4 1983009808
        %v1898 = vunpack.c.0.s8 %v1897
        %v1899 = vlaneseq
        %v1900 = vshrl.u32 %v1899, 7
        %v1901 = vsub.s32 %v1898, %v1900
        %v1902 = vrot.slane %v1893, %v1901
        %v1904 = vunpack.c.l.s4 1983009808
        %v1905 = vunpack.c.0.s8 %v1904
        %v1906 = vlaneseq
        %v1907 = vshrl.u32 %v1906, 7
        %v1908 = vsub.s32 %v1905, %v1907
        %v1909 = vrot.slane %v1895, %v1908
        %v1910 = vcombine.high %v1902, %v1902
        %1911 = vrot.lane.b32.xlu0 %v1902, 111
        %v1912 = vpop.permute.xlu0 %1911
        %1913 = vrot.lane.b32.xlu0 %v1910, 111
        %v1914 = vpop.permute.xlu0 %1913
        %1915 = vrot.lane.b32.xlu0 %v1909, 111
        %v1916 = vpop.permute.xlu0 %1915
        %v1917 = vsel %vm689, %v1912, %v1914
        %v1918 = vsel %vm689, %v1914, %v1916
        %v1920 = vsel %vm340, %v1892, 0
        %v1923 = vsel %vm344, %v1917, 0
        %v1926 = vsel %vm344, %v1918, 0
        %1928 = vmatprep.subr.bf16.mxu0 %v1926
        %1929 = vmatpush1.bf16.msra.mxu0 %v1923
        %1930 = vmatprep.subr.bf16.mxu0 0
        %1931 = vmatpush1.bf16.msra.mxu0 0
        %1932 = vmatprep.subr.bf16.mxu0 0
        %1933 = vmatpush1.bf16.msra.mxu0 0
        %1934 = vmatprep.subr.bf16.mxu0 0
        %1935 = vmatpush1.bf16.msra.mxu0 0
        %1936 = vmatprep.subr.bf16.mxu0 0
        %1937 = vmatpush1.bf16.msra.mxu0 0
        %1938 = vmatprep.subr.bf16.mxu0 0
        %1939 = vmatpush1.bf16.msra.mxu0 0
        %1940 = vmatprep.subr.bf16.mxu0 0
        %1941 = vmatpush1.bf16.msra.mxu0 0
        %1942 = vmatprep.subr.bf16.mxu0 0
        %1943 = vmatpush1.bf16.msra.mxu0 0
        %1944 = vmatprep.subr.bf16.mxu0 0
        %1945 = vmatpush1.bf16.msra.mxu0 0
        %1946 = vmatprep.subr.bf16.mxu0 0
        %1947 = vmatpush1.bf16.msra.mxu0 0
        %1948 = vmatprep.subr.bf16.mxu0 0
        %1949 = vmatpush1.bf16.msra.mxu0 0
        %1950 = vmatprep.subr.bf16.mxu0 0
        %1951 = vmatpush1.bf16.msra.mxu0 0
        %1952 = vmatprep.subr.bf16.mxu0 0
        %1953 = vmatpush1.bf16.msra.mxu0 0
        %1954 = vmatprep.subr.bf16.mxu0 0
        %1955 = vmatpush1.bf16.msra.mxu0 0
        %1956 = vmatprep.subr.bf16.mxu0 0
        %1957 = vmatpush1.bf16.msra.mxu0 0
        %1958 = vmatprep.subr.bf16.mxu0 0
        %1959 = vmatpush1.bf16.msra.mxu0 0
        %1960 = vmatprep.mubr.bf16.mxu0 0
        %1961 = vmatmul.mubr.bf16.gmra.mrb[0].mxu0 %v1920
        %v1962 = vpop.f32.mrb[0].mxu0
        %v1963 = vadd.f32 0.0, %v1962
        %v1964 = vpop.f32.mrb[0].mxu0
        %v1965 = vadd.f32 0.0, %v1964
        %v1966 = vpop.f32.mrb[0].mxu0
        %v1967 = vpop.f32.mrb[0].mxu0
        %1968 = vdwg.mxu0
        %v1969 = vadd.f32 %v1890, %v1963
        %v1970 = vadd.f32 %v1891, %v1965
        %vm1971 = vcmp.gt.f32.partialorder %v1969, 0.0
        %vm1972 = vcmp.gt.f32.partialorder %v1970, 0.0
        %v1973 = vmul.f32 %v1969, 0.2
        %v1974 = vmul.f32 %v1970, 0.2
        %v1975 = vsel %vm1971, %v1969, %v1973
        %v1976 = vsel %vm1972, %v1970, %v1974
        %v1977 = vpack.c.bf16 %v1975, %v1975
        %v1978 = vpack.c.bf16 %v1976, %v1976
        %v1981 = vunpack.c.l.b16 %v1977
        %v1982 = vunpack.c.l.b16 %v1978
        %v1983 = vpack.c.b16 %v1982, %v1981
        %1985 = vst [vmem:[%s217] sm:$0xff] %v1983
        %s1986 = sand.u32 %s137, 1
        %s1987 = scalar_lea.sflag [#allocation5], %s1986
        %s1988 = sand.u32 %s137, 1
        %s1989 = smul.addr %s1988, 8
        %s1990 = scalar_lea.vmem [#allocation4], %s1989
        // Predicated region
        $region41: #{tpu_custom_call.1} parent=39 // pred_check
          %p1991 = pneg %p147
        $region42: #{tpu_custom_call.1} parent=39 // pred_check_branch
          %1993 = sbr.rel (%p1991) target = $region44
        $region43: #{tpu_custom_call.1} parent=39 // pred_region
          %s1995 = ssub.s32 128, 128
          %1996 = vsyncadd %s1987, %s1995
          %s1997 = smul.addr %s19, 2
          %s1998 = smul.addr %s1997, 64
          %s1999 = scalar_lea.hbm %s5, %s1998
          %s2001 = sshll.u32 %s1990, 4
          %s2002 = int_to_ptr.vmem [resolvable:$true] %s2001
          %2004 = dma.vmem_to_hbm [thread:$0]  %s2002, 128, %s1999, %s1987
        $region44: #{tpu_custom_call.1} parent=39 // pred_fallthru
          _
      $region40: #{tpu_custom_call.1} parent=5 // pred_fallthru
        _
      %p2005 = scmp.le.s32.totalorder 2, %s14
      // Predicated region
      $region45: #{tpu_custom_call.1} parent=5 // pred_check
        %p2006 = pneg %p2005
      $region46: #{tpu_custom_call.1} parent=5 // pred_check_branch
        %2008 = sbr.rel (%p2006) target = $region48
      $region47: #{tpu_custom_call.1} parent=5 // pred_region
        %s2009 = ssub.s32 %s14, 2
        // Predicated region
        $region49: #{tpu_custom_call.1} parent=47 // pred_check
          %p2010 = pneg %p153
        $region50: #{tpu_custom_call.1} parent=47 // pred_check_branch
          %2012 = sbr.rel (%p2010) target = $region52
        $region51: #{tpu_custom_call.1} parent=47 // pred_region
          %s2013 = sand.u32 %s138, 1
          %s2014 = scalar_lea.sflag [#allocation5], %s2013
          %s2015 = sand.u32 %s138, 1
          %s2016 = smul.addr %s2015, 8
          %s2017 = scalar_lea.vmem [#allocation4], %s2016
          %2018 = dma.done %s2014, 128
        $region52: #{tpu_custom_call.1} parent=47 // pred_fallthru
          _
      $region48: #{tpu_custom_call.1} parent=5 // pred_fallthru
        _
    $region6: #{tpu_custom_call.1} parent=1 // loop_footer
      %s18 = sadd.s32 1, %s14
    $region7: #{tpu_custom_call.1} parent=1 // loop_footer_branch
      %13 = sbr.rel target = $region3
    $region8: #{tpu_custom_call.1} parent=1 // loop_exit
      _
    %2019 = vsyncpa [#allocation5], 1
    %s2020 = scalar_lea.sflag [#allocation5], 1
    %2021 = vsyncpa %s2020, 1

</llo_original>
